<compile_context>
chip_gen: v7x
topology: tpu7x:2x2x1
jax: 0.10.0
libtpu: 0.0.40
codegen_flags: <defaults>
</compile_context>

<pallas_src>
import functools

import jax
import jax.numpy as jnp
from jax.experimental import pallas as pl
from jax.experimental.pallas import tpu as pltpu


# ---------------------------------------------------------------------------
# Pallas kernels
# ---------------------------------------------------------------------------
def _matmul_bias_relu_kernel(p_ref, w_ref, b_ref, o_ref):
    # bf16 x bf16 matmul, f32 accumulate, fused (+bias, ReLU) epilogue.
    acc = jnp.dot(p_ref[...], w_ref[...], preferred_element_type=jnp.float32)
    o_ref[...] = jnp.maximum(acc + b_ref[...], 0.0).astype(o_ref.dtype)


def _final_assemble_kernel(p_ref, w_ref, b_ref, mid_ref, right_ref, o_ref):
    # branch13 matmul + direct assembly of the concatenated (left | mid | right) output.
    acc = jnp.dot(p_ref[...], w_ref[...], preferred_element_type=jnp.float32)
    left = jnp.maximum(acc + b_ref[...], 0.0)
    o_ref[...] = jnp.concatenate(
        [left,
         mid_ref[...].astype(jnp.float32),
         right_ref[...].astype(jnp.float32)],
        axis=-1,
    ).astype(o_ref.dtype)


# ---------------------------------------------------------------------------
# Pallas wrappers
# ---------------------------------------------------------------------------
def _choose_tm(M):
    # Adaptive M-tile: single (multiple-of-8) block for small M, else 128.
    if M >= 128:
        return 128
    return max(8, ((M + 7) // 8) * 8)


def fused_matmul_bias_relu(patches, w, bias, out_dtype=jnp.bfloat16):
    """patches: [M, K] bf16, w: [K, Cout] bf16, bias: [Cout] f32 -> [M, Cout] out_dtype."""
    M, K = patches.shape
    Cout = w.shape[1]
    TM = _choose_tm(M)
    Mp = pl.cdiv(M, TM) * TM
    if Mp != M:
        patches = jnp.pad(patches, ((0, Mp - M), (0, 0)))

    out = pl.pallas_call(
        _matmul_bias_relu_kernel,
        out_shape=jax.ShapeDtypeStruct((Mp, Cout), out_dtype),
        grid=(Mp // TM,),
        in_specs=[
            pl.BlockSpec((TM, K), lambda i: (i, 0)),     # patch tile
            pl.BlockSpec((K, Cout), lambda i: (0, 0)),   # full (folded) weight, resident
            pl.BlockSpec((1, Cout), lambda i: (0, 0)),   # folded BN bias
        ],
        out_specs=pl.BlockSpec((TM, Cout), lambda i: (i, 0)),
        compiler_params=pltpu.CompilerParams(dimension_semantics=("parallel",)),
    )(patches, w, bias.reshape(1, Cout))
    return out[:M] if Mp != M else out


def fused_final(patches, w, bias, mid, right):
    """branch13 matmul fused with the output-concat: returns [M, 32+Cm+Cr] f32."""
    M, K = patches.shape
    C13 = w.shape[1]
    Cm = mid.shape[1]
    Cr = right.shape[1]
    Cout = C13 + Cm + Cr
    TM = _choose_tm(M)
    Mp = pl.cdiv(M, TM) * TM
    if Mp != M:
        pad = ((0, Mp - M), (0, 0))
        patches = jnp.pad(patches, pad)
        mid = jnp.pad(mid, pad)
        right = jnp.pad(right, pad)

    out = pl.pallas_call(
        _final_assemble_kernel,
        out_shape=jax.ShapeDtypeStruct((Mp, Cout), jnp.float32),
        grid=(Mp // TM,),
        in_specs=[
            pl.BlockSpec((TM, K), lambda i: (i, 0)),     # branch13 patch tile
            pl.BlockSpec((K, C13), lambda i: (0, 0)),    # branch13 folded weight
            pl.BlockSpec((1, C13), lambda i: (0, 0)),    # branch13 folded bias
            pl.BlockSpec((TM, Cm), lambda i: (i, 0)),    # mid (branch22 out) pass-through
            pl.BlockSpec((TM, Cr), lambda i: (i, 0)),    # right (branch31 out) pass-through
        ],
        out_specs=pl.BlockSpec((TM, Cout), lambda i: (i, 0)),
        compiler_params=pltpu.CompilerParams(dimension_semantics=("parallel",)),
    )(patches, w, bias.reshape(1, C13), mid, right)
    return out[:M] if Mp != M else out


# ---------------------------------------------------------------------------
# JAX glue: im2col for 3x3 / pad=1 / stride=1 (pad fused in, bf16 patches)
# ---------------------------------------------------------------------------
def im2col_3x3_p1(x):
    """x: (N, H, W, C) bf16 -> (N*H*W, 9*C) with (kh, kw, c) feature order."""
    N, H, W, C = x.shape
    xp = jnp.pad(x, ((0, 0), (1, 1), (1, 1), (0, 0)))
    cols = [xp[:, i:i + H, j:j + W, :] for i in range(3) for j in range(3)]
    return jnp.concatenate(cols, axis=-1).reshape(N * H * W, 9 * C)


# ---------------------------------------------------------------------------
# Parameter construction (Conv bias + eval-mode BN folded into weight/bias)
# ---------------------------------------------------------------------------
def make_convbn_folded(key, cin, cout, k):
    wkey, bkey = jax.random.split(key)
    fan = k * k * cin
    w = jax.random.normal(wkey, (k, k, cin, cout), jnp.float32) * jnp.sqrt(2.0 / fan)
    conv_bias = jax.random.normal(bkey, (cout,), jnp.float32) * 0.01
    gamma = jnp.ones((cout,), jnp.float32)
    beta = jnp.zeros((cout,), jnp.float32)
    running_mean = jnp.zeros((cout,), jnp.float32)
    running_var = jnp.ones((cout,), jnp.float32)
    eps = 1e-5
    scale = gamma / jnp.sqrt(running_var + eps)          # f32 fold
    w_folded = w * scale                                  # (k,k,cin,cout) * (cout,)
    b_folded = (conv_bias - running_mean) * scale + beta
    return w_folded, b_folded


def build_params(key):
    keys = jax.random.split(key, 6)
    w11, b11 = make_convbn_folded(keys[0], 256, 16, 1)
    w12, b12 = make_convbn_folded(keys[1], 16, 32, 3)
    w13, b13 = make_convbn_folded(keys[2], 32, 32, 3)
    w21, b21 = make_convbn_folded(keys[3], 256, 32, 1)
    w22, b22 = make_convbn_folded(keys[4], 32, 96, 3)
    w31, b31 = make_convbn_folded(keys[5], 256, 128, 1)

    # Stage 1: fused 1x1 heads, Cout order = [branch11 | branch21 | branch31] = 176.
    w1 = jnp.concatenate(
        [w11.reshape(256, 16), w21.reshape(256, 32), w31.reshape(256, 128)], axis=1)
    b1 = jnp.concatenate([b11, b21, b31])

    # Stage 2: block-diagonal 3x3 over the (branch11 | branch21) 48-channel map.
    #   rows for channels 0:16  -> branch12 weights (outputs 0:32)
    #   rows for channels 16:48 -> branch22 weights (outputs 32:128)
    w2 = jnp.zeros((3, 3, 48, 128), jnp.float32)
    w2 = w2.at[:, :, :16, :32].set(w12)
    w2 = w2.at[:, :, 16:, 32:].set(w22)
    w2 = w2.reshape(9 * 48, 128)
    b2 = jnp.concatenate([b12, b22])

    # Stage 3: branch13 3x3.
    w13f = w13.reshape(9 * 32, 32)

    return {
        "w1": w1.astype(jnp.bfloat16), "b1": b1,
        "w2": w2.astype(jnp.bfloat16), "b2": b2,
        "w13": w13f.astype(jnp.bfloat16), "b13": b13,
    }


# ---------------------------------------------------------------------------
# Inception4c forward
# ---------------------------------------------------------------------------
@functools.partial(jax.jit)
def inception4c_forward(x_nchw, P):
    x = jnp.transpose(x_nchw, (0, 2, 3, 1)).astype(jnp.bfloat16)  # NCHW -> NHWC, bf16
    N, H, W, C = x.shape
    M = N * H * W

    # Stage 1: fused 1x1 branch heads (no im2col needed for 1x1 / stride 1 / pad 0).
    y1 = fused_matmul_bias_relu(x.reshape(M, C), P["w1"], P["b1"])      # [M, 176]
    feats48 = y1[:, :48].reshape(N, H, W, 48)   # branch11(16) | branch21(32) outputs
    right = y1[:, 48:176]                        # branch31 output (128 ch)

    # Stage 2: fused 3x3 (branch12 | branch22) via block-diagonal weights.
    p2 = im2col_3x3_p1(feats48)                                          # [M, 432]
    y2 = fused_matmul_bias_relu(p2, P["w2"], P["b2"])                    # [M, 128]
    left12 = y2[:, :32].reshape(N, H, W, 32)     # branch12 output
    mid = y2[:, 32:128]                          # branch22 output (96 ch)

    # Stage 3: branch13 3x3, written directly into the concatenated block output.
    p3 = im2col_3x3_p1(left12)                                           # [M, 288]
    out = fused_final(p3, P["w13"], P["b13"], mid, right)                # [M, 256] f32

    out = out.reshape(N, H, W, 256)
    return jnp.transpose(out, (0, 3, 1, 2))      # back to NCHW


if __name__ == "__main__":
    key = jax.random.PRNGKey(0)
    pkey, xkey = jax.random.split(key)
    params = build_params(pkey)
    x = jax.random.normal(xkey, (2, 256, 16, 16), jnp.float32)  # NCHW, like PyTorch

    out = inception4c_forward(x, params)
    jax.block_until_ready(out)

    # 32 (left) + 96 (mid) + 128 (right) = 256 channels, spatial preserved.
    assert out.shape == (2, 256, 16, 16), out.shape
    assert bool(jnp.all(jnp.isfinite(out)))
    print("KERNEL_OK")
</pallas_src>

<mosaic_0001>
module attributes {stable_mosaic.version = 11 : i64} {
  func.func @_matmul_bias_relu_kernel(%arg0: i32, %arg1: memref<128x256xbf16, #tpu.memory_space<vmem>>, %arg2: memref<256x176xbf16, #tpu.memory_space<vmem>>, %arg3: memref<1x176xf32, #tpu.memory_space<vmem>>, %arg4: memref<128x176xbf16, #tpu.memory_space<vmem>>) attributes {dimension_semantics = [#tpu.dimension_semantics<parallel>], iteration_bounds = array<i64: 4>, scalar_prefetch = 0 : i64, scratch_operands = 0 : i64, tpu.core_type = #tpu.core_type<tc>, window_params = [{transform_indices = @transform_0, window_bounds = array<i64: 128, 256>}, {pipeline_mode = #tpu.pipeline_mode<synchronous>, transform_indices = @transform_1, window_bounds = array<i64: 256, 176>}, {pipeline_mode = #tpu.pipeline_mode<synchronous>, transform_indices = @transform_2, window_bounds = array<i64: 1, 176>}, {transform_indices = @transform_3, window_bounds = array<i64: 128, 176>}]} {
    %c0 = arith.constant 0 : index
    %c0_0 = arith.constant 0 : index
    %0 = vector.load %arg1[%c0, %c0_0] : memref<128x256xbf16, #tpu.memory_space<vmem>>, vector<128x256xbf16>
    %c0_1 = arith.constant 0 : index
    %c0_2 = arith.constant 0 : index
    %1 = vector.load %arg2[%c0_1, %c0_2] : memref<256x176xbf16, #tpu.memory_space<vmem>>, vector<256x176xbf16>
    %cst = arith.constant dense<0.000000e+00> : vector<128x176xf32>
    %2 = tpu.matmul %0, %1, %cst {dimension_numbers = #tpu.dot_dimension_numbers<[1], [0], [0], [1], [0, 0, 1, 1], [], []>} : vector<128x256xbf16>, vector<256x176xbf16>, vector<128x176xf32> -> vector<128x176xf32>
    %c0_3 = arith.constant 0 : index
    %c0_4 = arith.constant 0 : index
    %3 = vector.load %arg3[%c0_3, %c0_4] : memref<1x176xf32, #tpu.memory_space<vmem>>, vector<1x176xf32>
    %4 = vector.broadcast %3 : vector<1x176xf32> to vector<128x176xf32>
    %5 = arith.addf %2, %4 : vector<128x176xf32>
    %cst_5 = arith.constant 0.000000e+00 : f32
    %6 = vector.broadcast %cst_5 : f32 to vector<128x176xf32>
    %7 = arith.maximumf %5, %6 : vector<128x176xf32>
    %8 = arith.truncf %7 : vector<128x176xf32> to vector<128x176xbf16>
    %c0_6 = arith.constant 0 : index
    %c0_7 = arith.constant 0 : index
    %9 = vector.load %arg4[%c0_6, %c0_7] : memref<128x176xbf16, #tpu.memory_space<vmem>>, vector<128x176xbf16>
    tpu.vector_store %arg4[%c0_6, %c0_7], %8 {strides = array<i32>} : memref<128x176xbf16, #tpu.memory_space<vmem>>, vector<128x176xbf16>,
    return
  }
  func.func @transform_0(%arg0: i32) -> (i32, i32) {
    %c0_i32 = arith.constant 0 : i32
    %c0_i32_0 = arith.constant 0 : i32
    return %arg0, %c0_i32 : i32, i32
  }
  func.func @transform_1(%arg0: i32) -> (i32, i32) {
    %c0_i32 = arith.constant 0 : i32
    %c0_i32_0 = arith.constant 0 : i32
    %c0_i32_1 = arith.constant 0 : i32
    return %c0_i32, %c0_i32_0 : i32, i32
  }
  func.func @transform_2(%arg0: i32) -> (i32, i32) {
    %c0_i32 = arith.constant 0 : i32
    %c0_i32_0 = arith.constant 0 : i32
    %c0_i32_1 = arith.constant 0 : i32
    return %c0_i32, %c0_i32_0 : i32, i32
  }
  func.func @transform_3(%arg0: i32) -> (i32, i32) {
    %c0_i32 = arith.constant 0 : i32
    %c0_i32_0 = arith.constant 0 : i32
    return %arg0, %c0_i32 : i32, i32
  }
}

module attributes {stable_mosaic.version = 11 : i64} {
  func.func @_matmul_bias_relu_kernel(%arg0: i32, %arg1: memref<128x432xbf16, #tpu.memory_space<vmem>>, %arg2: memref<432x128xbf16, #tpu.memory_space<vmem>>, %arg3: memref<1x128xf32, #tpu.memory_space<vmem>>, %arg4: memref<128x128xbf16, #tpu.memory_space<vmem>>) attributes {dimension_semantics = [#tpu.dimension_semantics<parallel>], iteration_bounds = array<i64: 4>, scalar_prefetch = 0 : i64, scratch_operands = 0 : i64, tpu.core_type = #tpu.core_type<tc>, window_params = [{transform_indices = @transform_0, window_bounds = array<i64: 128, 432>}, {pipeline_mode = #tpu.pipeline_mode<synchronous>, transform_indices = @transform_1, window_bounds = array<i64: 432, 128>}, {pipeline_mode = #tpu.pipeline_mode<synchronous>, transform_indices = @transform_2, window_bounds = array<i64: 1, 128>}, {transform_indices = @transform_3, window_bounds = array<i64: 128, 128>}]} {
    %c0 = arith.constant 0 : index
    %c0_0 = arith.constant 0 : index
    %0 = vector.load %arg1[%c0, %c0_0] : memref<128x432xbf16, #tpu.memory_space<vmem>>, vector<128x432xbf16>
    %c0_1 = arith.constant 0 : index
    %c0_2 = arith.constant 0 : index
    %1 = vector.load %arg2[%c0_1, %c0_2] : memref<432x128xbf16, #tpu.memory_space<vmem>>, vector<432x128xbf16>
    %cst = arith.constant dense<0.000000e+00> : vector<128x128xf32>
    %2 = tpu.matmul %0, %1, %cst {dimension_numbers = #tpu.dot_dimension_numbers<[1], [0], [0], [1], [0, 0, 1, 1], [], []>} : vector<128x432xbf16>, vector<432x128xbf16>, vector<128x128xf32> -> vector<128x128xf32>
    %c0_3 = arith.constant 0 : index
    %c0_4 = arith.constant 0 : index
    %3 = vector.load %arg3[%c0_3, %c0_4] : memref<1x128xf32, #tpu.memory_space<vmem>>, vector<1x128xf32>
    %4 = vector.broadcast %3 : vector<1x128xf32> to vector<128x128xf32>
    %5 = arith.addf %2, %4 : vector<128x128xf32>
    %cst_5 = arith.constant 0.000000e+00 : f32
    %6 = vector.broadcast %cst_5 : f32 to vector<128x128xf32>
    %7 = arith.maximumf %5, %6 : vector<128x128xf32>
    %8 = arith.truncf %7 : vector<128x128xf32> to vector<128x128xbf16>
    %c0_6 = arith.constant 0 : index
    %c0_7 = arith.constant 0 : index
    %9 = vector.load %arg4[%c0_6, %c0_7] : memref<128x128xbf16, #tpu.memory_space<vmem>>, vector<128x128xbf16>
    tpu.vector_store %arg4[%c0_6, %c0_7], %8 {strides = array<i32>} : memref<128x128xbf16, #tpu.memory_space<vmem>>, vector<128x128xbf16>,
    return
  }
  func.func @transform_0(%arg0: i32) -> (i32, i32) {
    %c0_i32 = arith.constant 0 : i32
    %c0_i32_0 = arith.constant 0 : i32
    return %arg0, %c0_i32 : i32, i32
  }
  func.func @transform_1(%arg0: i32) -> (i32, i32) {
    %c0_i32 = arith.constant 0 : i32
    %c0_i32_0 = arith.constant 0 : i32
    %c0_i32_1 = arith.constant 0 : i32
    return %c0_i32, %c0_i32_0 : i32, i32
  }
  func.func @transform_2(%arg0: i32) -> (i32, i32) {
    %c0_i32 = arith.constant 0 : i32
    %c0_i32_0 = arith.constant 0 : i32
    %c0_i32_1 = arith.constant 0 : i32
    return %c0_i32, %c0_i32_0 : i32, i32
  }
  func.func @transform_3(%arg0: i32) -> (i32, i32) {
    %c0_i32 = arith.constant 0 : i32
    %c0_i32_0 = arith.constant 0 : i32
    return %arg0, %c0_i32 : i32, i32
  }
}

module attributes {stable_mosaic.version = 11 : i64} {
  func.func @_final_assemble_kernel(%arg0: i32, %arg1: memref<128x288xbf16, #tpu.memory_space<vmem>>, %arg2: memref<288x32xbf16, #tpu.memory_space<vmem>>, %arg3: memref<1x32xf32, #tpu.memory_space<vmem>>, %arg4: memref<128x96xbf16, #tpu.memory_space<vmem>>, %arg5: memref<128x128xbf16, #tpu.memory_space<vmem>>, %arg6: memref<128x256xf32, #tpu.memory_space<vmem>>) attributes {dimension_semantics = [#tpu.dimension_semantics<parallel>], iteration_bounds = array<i64: 4>, scalar_prefetch = 0 : i64, scratch_operands = 0 : i64, tpu.core_type = #tpu.core_type<tc>, window_params = [{transform_indices = @transform_0, window_bounds = array<i64: 128, 288>}, {pipeline_mode = #tpu.pipeline_mode<synchronous>, transform_indices = @transform_1, window_bounds = array<i64: 288, 32>}, {pipeline_mode = #tpu.pipeline_mode<synchronous>, transform_indices = @transform_2, window_bounds = array<i64: 1, 32>}, {transform_indices = @transform_3, window_bounds = array<i64: 128, 96>}, {transform_indices = @transform_4, window_bounds = array<i64: 128, 128>}, {transform_indices = @transform_5, window_bounds = array<i64: 128, 256>}]} {
    %c0 = arith.constant 0 : index
    %c0_0 = arith.constant 0 : index
    %0 = vector.load %arg1[%c0, %c0_0] : memref<128x288xbf16, #tpu.memory_space<vmem>>, vector<128x288xbf16>
    %c0_1 = arith.constant 0 : index
    %c0_2 = arith.constant 0 : index
    %1 = vector.load %arg2[%c0_1, %c0_2] : memref<288x32xbf16, #tpu.memory_space<vmem>>, vector<288x32xbf16>
    %cst = arith.constant dense<0.000000e+00> : vector<128x32xf32>
    %2 = tpu.matmul %0, %1, %cst {dimension_numbers = #tpu.dot_dimension_numbers<[1], [0], [0], [1], [0, 0, 1, 1], [], []>} : vector<128x288xbf16>, vector<288x32xbf16>, vector<128x32xf32> -> vector<128x32xf32>
    %c0_3 = arith.constant 0 : index
    %c0_4 = arith.constant 0 : index
    %3 = vector.load %arg3[%c0_3, %c0_4] : memref<1x32xf32, #tpu.memory_space<vmem>>, vector<1x32xf32>
    %4 = vector.broadcast %3 : vector<1x32xf32> to vector<128x32xf32>
    %5 = arith.addf %2, %4 : vector<128x32xf32>
    %cst_5 = arith.constant 0.000000e+00 : f32
    %6 = vector.broadcast %cst_5 : f32 to vector<128x32xf32>
    %7 = arith.maximumf %5, %6 : vector<128x32xf32>
    %c0_6 = arith.constant 0 : index
    %c0_7 = arith.constant 0 : index
    %8 = vector.load %arg4[%c0_6, %c0_7] : memref<128x96xbf16, #tpu.memory_space<vmem>>, vector<128x96xbf16>
    %9 = arith.extf %8 : vector<128x96xbf16> to vector<128x96xf32>
    %c0_8 = arith.constant 0 : index
    %c0_9 = arith.constant 0 : index
    %10 = vector.load %arg5[%c0_8, %c0_9] : memref<128x128xbf16, #tpu.memory_space<vmem>>, vector<128x128xbf16>
    %11 = arith.extf %10 : vector<128x128xbf16> to vector<128x128xf32>
    %12 = tpu.concatenate %7, %9, %11 in 1 : vector<128x32xf32>, vector<128x96xf32>, vector<128x128xf32> -> vector<128x256xf32>
    %c0_10 = arith.constant 0 : index
    %c0_11 = arith.constant 0 : index
    %13 = vector.load %arg6[%c0_10, %c0_11] : memref<128x256xf32, #tpu.memory_space<vmem>>, vector<128x256xf32>
    tpu.vector_store %arg6[%c0_10, %c0_11], %12 {strides = array<i32>} : memref<128x256xf32, #tpu.memory_space<vmem>>, vector<128x256xf32>,
    return
  }
  func.func @transform_0(%arg0: i32) -> (i32, i32) {
    %c0_i32 = arith.constant 0 : i32
    %c0_i32_0 = arith.constant 0 : i32
    return %arg0, %c0_i32 : i32, i32
  }
  func.func @transform_1(%arg0: i32) -> (i32, i32) {
    %c0_i32 = arith.constant 0 : i32
    %c0_i32_0 = arith.constant 0 : i32
    %c0_i32_1 = arith.constant 0 : i32
    return %c0_i32, %c0_i32_0 : i32, i32
  }
  func.func @transform_2(%arg0: i32) -> (i32, i32) {
    %c0_i32 = arith.constant 0 : i32
    %c0_i32_0 = arith.constant 0 : i32
    %c0_i32_1 = arith.constant 0 : i32
    return %c0_i32, %c0_i32_0 : i32, i32
  }
  func.func @transform_3(%arg0: i32) -> (i32, i32) {
    %c0_i32 = arith.constant 0 : i32
    %c0_i32_0 = arith.constant 0 : i32
    return %arg0, %c0_i32 : i32, i32
  }
  func.func @transform_4(%arg0: i32) -> (i32, i32) {
    %c0_i32 = arith.constant 0 : i32
    %c0_i32_0 = arith.constant 0 : i32
    return %arg0, %c0_i32 : i32, i32
  }
  func.func @transform_5(%arg0: i32) -> (i32, i32) {
    %c0_i32 = arith.constant 0 : i32
    %c0_i32_0 = arith.constant 0 : i32
    return %arg0, %c0_i32 : i32, i32
  }
}

</mosaic_0001>

<llo_original>
// kernel: inception4c_forward.3
$region0: #{inception4c_forward.3}
  #allocation0 [shape = 'u32[]', space=smem, size = 0x4, offset = 0x4, fixed_abs, tag = 'smem constant byte address 0x4 - core index']
  #allocation1 [shape = 'u32[144,128]{1,0:T(1,128)}', space=vmem, size = 0x12000, scoped, tag = 'internal scratch']
  %s0 = inlined_call_operand.vmem [shape: bf16[512,256], index: 0, kind: input, shape index: {}]
  %s1 = inlined_call_operand.vmem [shape: bf16[256,176], index: 1, kind: input, shape index: {}]
  %s2 = inlined_call_operand.vmem [shape: f32[1,176], index: 2, kind: input, shape index: {}]
  %s3 = inlined_call_operand.vmem [shape: bf16[512,176], index: 3, kind: output, shape index: {}]
  %s4 = sld [smem:[#allocation0]]
  $region45: #{inception4c_forward.3} parent=0
    _
  %s6 = ssub.s32 1, %s4
  %s7 = scalar_select 0, %s6, %s4
  loop: start=0, step=1, limit=6
  $region2: #{inception4c_forward.3} parent=0 // loop_pre_header
    _
  $region3: #{inception4c_forward.3} parent=0 // loop_header
    %s9 = sphi 0, %s13
    %p10 = scmp.ge.s32.totalorder %s9, 6
    %s19 = sphi 0, %s21
    %s22 = sphi 0, %s19
    %s23 = sphi 0, %s22
    %s39 = sphi 0, %s23
    %s43 = sphi 0, %s43
    %s45 = sphi 0, %s43
    %s46 = sphi 0, %s45
    %s60 = sphi 0, %s46
    %s64 = sphi 0, %s64
    %s66 = sphi 0, %s64
    %s67 = sphi 0, %s66
    %s81 = sphi 0, %s67
    %s87 = sphi 0, %s89
    %s90 = sphi 0, %s87
    %s91 = sphi 0, %s90
    %s107 = sphi 0, %s91
  $region4: #{inception4c_forward.3} parent=0 // loop_header_branch
    %12 = sbr.rel (%p10) target = $region8
  $region5: #{inception4c_forward.3} parent=0 // loop_body
    %s14 = ssub.s32 %s9, 1
    %s15 = ssub.s32 %s9, 2
    %s16 = sadd.s32 %s9, 1
    %s17 = ssub.s32 %s9, %s16
    %p18 = scmp.eq.s32.totalorder %s17, 0
    %s20 = sadd.s32 %s19, 1
    %s21 = scalar_select %p18, %s19, %s20
    %p24 = pneg %p18
    %p25 = scmp.eq.s32.totalorder %s9, 3
    %p26 = por %p24, %p25
    %p27 = scmp.ne.s32.totalorder %s19, %s22
    %p28 = scmp.eq.s32.totalorder %s9, 0
    %p29 = por %p27, %p28
    %p30 = scmp.ne.s32.totalorder %s19, %s22
    %p31 = scmp.eq.s32.totalorder %s14, 3
    %p32 = por %p30, %p31
    %p33 = scmp.ne.s32.totalorder %s22, %s23
    %p34 = scmp.eq.s32.totalorder %s14, 0
    %p35 = por %p33, %p34
    %p36 = scmp.ne.s32.totalorder %s22, %s23
    %p37 = scmp.eq.s32.totalorder %s15, 3
    %p38 = por %p36, %p37
    %p40 = scmp.ne.s32.totalorder %s23, %s39
    %p41 = scmp.eq.s32.totalorder %s15, 0
    %p42 = por %p40, %p41
    %s44 = sadd.s32 %s43, 1
    %p47 = scmp.eq.s32.totalorder %s9, 3
    %p48 = scmp.ne.s32.totalorder %s43, %s45
    %p49 = scmp.eq.s32.totalorder %s9, 0
    %p50 = por %p48, %p49
    %p51 = scmp.ne.s32.totalorder %s43, %s45
    %p52 = scmp.eq.s32.totalorder %s14, 3
    %p53 = por %p51, %p52
    %p54 = scmp.ne.s32.totalorder %s45, %s46
    %p55 = scmp.eq.s32.totalorder %s14, 0
    %p56 = por %p54, %p55
    %p57 = scmp.ne.s32.totalorder %s45, %s46
    %p58 = scmp.eq.s32.totalorder %s15, 3
    %p59 = por %p57, %p58
    %p61 = scmp.ne.s32.totalorder %s46, %s60
    %p62 = scmp.eq.s32.totalorder %s15, 0
    %p63 = por %p61, %p62
    %s65 = sadd.s32 %s64, 1
    %p68 = scmp.eq.s32.totalorder %s9, 3
    %p69 = scmp.ne.s32.totalorder %s64, %s66
    %p70 = scmp.eq.s32.totalorder %s9, 0
    %p71 = por %p69, %p70
    %p72 = scmp.ne.s32.totalorder %s64, %s66
    %p73 = scmp.eq.s32.totalorder %s14, 3
    %p74 = por %p72, %p73
    %p75 = scmp.ne.s32.totalorder %s66, %s67
    %p76 = scmp.eq.s32.totalorder %s14, 0
    %p77 = por %p75, %p76
    %p78 = scmp.ne.s32.totalorder %s66, %s67
    %p79 = scmp.eq.s32.totalorder %s15, 3
    %p80 = por %p78, %p79
    %p82 = scmp.ne.s32.totalorder %s67, %s81
    %p83 = scmp.eq.s32.totalorder %s15, 0
    %p84 = por %p82, %p83
    %s85 = ssub.s32 %s9, %s16
    %p86 = scmp.eq.s32.totalorder %s85, 0
    %s88 = sadd.s32 %s87, 1
    %s89 = scalar_select %p86, %s87, %s88
    %p92 = pneg %p86
    %p93 = scmp.eq.s32.totalorder %s9, 3
    %p94 = por %p92, %p93
    %p95 = scmp.ne.s32.totalorder %s87, %s90
    %p96 = scmp.eq.s32.totalorder %s9, 0
    %p97 = por %p95, %p96
    %p98 = scmp.ne.s32.totalorder %s87, %s90
    %p99 = scmp.eq.s32.totalorder %s14, 3
    %p100 = por %p98, %p99
    %p101 = scmp.ne.s32.totalorder %s90, %s91
    %p102 = scmp.eq.s32.totalorder %s14, 0
    %p103 = por %p101, %p102
    %p104 = scmp.ne.s32.totalorder %s90, %s91
    %p105 = scmp.eq.s32.totalorder %s15, 3
    %p106 = por %p104, %p105
    %p108 = scmp.ne.s32.totalorder %s91, %s107
    %p109 = scmp.eq.s32.totalorder %s15, 0
    %p110 = por %p108, %p109
    %p111 = scmp.le.s32.totalorder 1, %s9
    %p112 = scmp.lt.s32.totalorder %s9, 5
    %p113 = pnand %p111, %p112
    %p114 = pneg %p113
    // Predicated region
    $region9: #{inception4c_forward.3} parent=5 // pred_check
      _
    $region10: #{inception4c_forward.3} parent=5 // pred_check_branch
      %116 = sbr.rel (%p113) target = $region12
    $region11: #{inception4c_forward.3} parent=5 // pred_region
      %s117 = ssub.s32 %s9, 1
      // Predicated region
      $region13: #{inception4c_forward.3} parent=11 // pred_check
        %p118 = pneg %p56
      $region14: #{inception4c_forward.3} parent=11 // pred_check_branch
        %120 = sbr.rel (%p118) target = $region16
      $region15: #{inception4c_forward.3} parent=11 // pred_region
        _
      $region16: #{inception4c_forward.3} parent=11 // pred_fallthru
        _
      // Predicated region
      $region17: #{inception4c_forward.3} parent=11 // pred_check
        %p121 = pneg %p77
      $region18: #{inception4c_forward.3} parent=11 // pred_check_branch
        %123 = sbr.rel (%p121) target = $region20
      $region19: #{inception4c_forward.3} parent=11 // pred_region
        _
      $region20: #{inception4c_forward.3} parent=11 // pred_fallthru
        _
    $region12: #{inception4c_forward.3} parent=5 // pred_fallthru
      _
    %p124 = scmp.lt.s32.totalorder %s9, 4
    // Predicated region
    $region21: #{inception4c_forward.3} parent=5 // pred_check
      %p125 = pneg %p124
    $region22: #{inception4c_forward.3} parent=5 // pred_check_branch
      %127 = sbr.rel (%p125) target = $region24
    $region23: #{inception4c_forward.3} parent=5 // pred_region
      // Predicated region
      $region25: #{inception4c_forward.3} parent=23 // pred_check
        %p128 = pneg %p29
      $region26: #{inception4c_forward.3} parent=23 // pred_check_branch
        %130 = sbr.rel (%p128) target = $region28
      $region27: #{inception4c_forward.3} parent=23 // pred_region
        %s131 = smul.u32 16, %s9
        %p132 = scmp.lt.s32.totalorder %s131, 63
        %s133 = scalar_select %p132, %s131, 63
        %s134 = smul.addr %s133, 2
        %s135 = smul.addr %s134, 4
        %s136 = scalar_lea.vmem %s0, %s135
        %s137 = smul.u32 16, %s9
      $region28: #{inception4c_forward.3} parent=23 // pred_fallthru
        _
    $region24: #{inception4c_forward.3} parent=5 // pred_fallthru
      _
    %p138 = scmp.le.s32.totalorder 1, %s9
    %p139 = scmp.lt.s32.totalorder %s9, 5
    %p140 = pnand %p138, %p139
    %p141 = pneg %p140
    // Predicated region
    $region29: #{inception4c_forward.3} parent=5 // pred_check
      _
    $region30: #{inception4c_forward.3} parent=5 // pred_check_branch
      %143 = sbr.rel (%p140) target = $region32
    $region31: #{inception4c_forward.3} parent=5 // pred_region
      %s144 = ssub.s32 %s9, 1
      %s145 = smul.u32 16, %s14
      %p146 = scmp.lt.s32.totalorder %s145, 63
      %s147 = scalar_select %p146, %s145, 63
      %s148 = smul.addr %s147, 2
      %s149 = smul.addr %s148, 4
      %s150 = scalar_lea.vmem %s0, %s149
      %p151 = pneg %p35
      %p152 = pneg %p32
      %p153 = pneg %p56
      %p154 = pneg %p53
      %p155 = pneg %p77
      %p156 = pneg %p74
      %p157 = pneg %p103
      %p158 = pneg %p100
      %s159 = smul.u32 16, %s14
      %p160 = scmp.lt.s32.totalorder %s159, 63
      %s161 = scalar_select %p160, %s159, 63
      %s162 = smul.addr %s161, 2
      %s163 = smul.addr %s162, 4
      %s164 = scalar_lea.vmem %s3, %s163
      %s165 = smul.u32 16, %s14
      %p166 = scmp.lt.s32.totalorder %s165, 63
      %s167 = scalar_select %p166, %s165, 63
      %s168 = smul.addr %s167, 2
      %s169 = smul.addr %s168, 4
      %s170 = scalar_lea.vmem %s0, %s169
      %s171 = smul.u32 16, %s14
      %s172 = smul.u32 16, %s14
      %p173 = scmp.lt.s32.totalorder %s172, 63
      %s174 = scalar_select %p173, %s172, 63
      %s175 = smul.addr %s174, 2
      %s176 = smul.addr %s175, 4
      %s177 = scalar_lea.vmem %s3, %s176
      %s178 = smul.u32 16, %s14
      %v179 = vld [vmem:[%s170] sm:$0xff]
      %v180 = vld [vmem:[%s170 + $0x8] sm:$0xff]
      %v181 = vld [vmem:[%s170 + $0x10] sm:$0xff]
      %v182 = vld [vmem:[%s170 + $0x18] sm:$0xff]
      %v183 = vld [vmem:[%s170 + $0x20] sm:$0xff]
      %v184 = vld [vmem:[%s170 + $0x28] sm:$0xff]
      %v185 = vld [vmem:[%s170 + $0x30] sm:$0xff]
      %v186 = vld [vmem:[%s170 + $0x38] sm:$0xff]
      %v187 = vld [vmem:[%s170 + $0x40] sm:$0xff]
      %v188 = vld [vmem:[%s170 + $0x48] sm:$0xff]
      %v189 = vld [vmem:[%s170 + $0x50] sm:$0xff]
      %v190 = vld [vmem:[%s170 + $0x58] sm:$0xff]
      %v191 = vld [vmem:[%s170 + $0x60] sm:$0xff]
      %v192 = vld [vmem:[%s170 + $0x68] sm:$0xff]
      %v193 = vld [vmem:[%s170 + $0x70] sm:$0xff]
      %v194 = vld [vmem:[%s170 + $0x78] sm:$0xff]
      %v195 = vld [vmem:[%s1] sm:$0xff]
      %v196 = vld [vmem:[%s1 + $0x8] sm:$0xff]
      %v197 = vld [vmem:[%s1 + $0x10] sm:$0xff]
      %v198 = vld [vmem:[%s1 + $0x18] sm:$0xff]
      %v199 = vld [vmem:[%s1 + $0x20] sm:$0xff]
      %v200 = vld [vmem:[%s1 + $0x28] sm:$0xff]
      %v201 = vld [vmem:[%s1 + $0x30] sm:$0xff]
      %v202 = vld [vmem:[%s1 + $0x38] sm:$0xff]
      %v203 = vld [vmem:[%s1 + $0x40] sm:$0xff]
      %v204 = vld [vmem:[%s1 + $0x48] sm:$0xff]
      %v205 = vld [vmem:[%s1 + $0x50] sm:$0xff]
      %v206 = vld [vmem:[%s1 + $0x58] sm:$0xff]
      %v207 = vld [vmem:[%s1 + $0x60] sm:$0xff]
      %v208 = vld [vmem:[%s1 + $0x68] sm:$0xff]
      %v209 = vld [vmem:[%s1 + $0x70] sm:$0xff]
      %v210 = vld [vmem:[%s1 + $0x78] sm:$0xff]
      %v211 = vld [vmem:[%s1 + $0x80] sm:$0xff]
      %v212 = vld [vmem:[%s1 + $0x88] sm:$0xff]
      %v213 = vld [vmem:[%s1 + $0x90] sm:$0xff]
      %v214 = vld [vmem:[%s1 + $0x98] sm:$0xff]
      %v215 = vld [vmem:[%s1 + $0xa0] sm:$0xff]
      %v216 = vld [vmem:[%s1 + $0xa8] sm:$0xff]
      %v217 = vld [vmem:[%s1 + $0xb0] sm:$0xff]
      %v218 = vld [vmem:[%s1 + $0xb8] sm:$0xff]
      %v219 = vld [vmem:[%s1 + $0xc0] sm:$0xff]
      %v220 = vld [vmem:[%s1 + $0xc8] sm:$0xff]
      %v221 = vld [vmem:[%s1 + $0xd0] sm:$0xff]
      %v222 = vld [vmem:[%s1 + $0xd8] sm:$0xff]
      %v223 = vld [vmem:[%s1 + $0xe0] sm:$0xff]
      %v224 = vld [vmem:[%s1 + $0xe8] sm:$0xff]
      %v225 = vld [vmem:[%s1 + $0xf0] sm:$0xff]
      %v226 = vld [vmem:[%s1 + $0xf8] sm:$0xff]
      %v227 = vld [vmem:[%s2] sm:$0x3]
      %v229 = vlaneseq
      %v230 = vshrl.u32 %v229, 7
      %v231 = vsub.s32 0, %v230
      %v232 = vrot.slane %v227, %v231
      %v233 = vlaneseq
      %v234 = vshrl.u32 %v233, 7
      %v235 = vsub.s32 1, %v234
      %v236 = vrot.slane %v227, %v235
      %v255 = vunpack.c.l.b16 %v179
      %v256 = vunpack.c.h.b16 %v179
      %v257 = vunpack.c.l.b16 %v180
      %v258 = vunpack.c.h.b16 %v180
      %v259 = vunpack.c.l.b16 %v181
      %v260 = vunpack.c.h.b16 %v181
      %v261 = vunpack.c.l.b16 %v182
      %v262 = vunpack.c.h.b16 %v182
      %v263 = vunpack.c.l.b16 %v183
      %v264 = vunpack.c.h.b16 %v183
      %v265 = vunpack.c.l.b16 %v184
      %v266 = vunpack.c.h.b16 %v184
      %v267 = vunpack.c.l.b16 %v185
      %v268 = vunpack.c.h.b16 %v185
      %v269 = vunpack.c.l.b16 %v186
      %v270 = vunpack.c.h.b16 %v186
      %v271 = vunpack.c.l.b16 %v187
      %v272 = vunpack.c.h.b16 %v187
      %v273 = vunpack.c.l.b16 %v188
      %v274 = vunpack.c.h.b16 %v188
      %v275 = vunpack.c.l.b16 %v189
      %v276 = vunpack.c.h.b16 %v189
      %v277 = vunpack.c.l.b16 %v190
      %v278 = vunpack.c.h.b16 %v190
      %v279 = vunpack.c.l.b16 %v191
      %v280 = vunpack.c.h.b16 %v191
      %v281 = vunpack.c.l.b16 %v192
      %v282 = vunpack.c.h.b16 %v192
      %v283 = vunpack.c.l.b16 %v193
      %v284 = vunpack.c.h.b16 %v193
      %v285 = vunpack.c.l.b16 %v194
      %v286 = vunpack.c.h.b16 %v194
      %v287 = vpack.c.b16 %v257, %v255
      %v288 = vpack.c.b16 %v258, %v256
      %v289 = vpack.c.b16 %v261, %v259
      %v290 = vpack.c.b16 %v262, %v260
      %v291 = vpack.c.b16 %v265, %v263
      %v292 = vpack.c.b16 %v266, %v264
      %v293 = vpack.c.b16 %v269, %v267
      %v294 = vpack.c.b16 %v270, %v268
      %v295 = vpack.c.b16 %v273, %v271
      %v296 = vpack.c.b16 %v274, %v272
      %v297 = vpack.c.b16 %v277, %v275
      %v298 = vpack.c.b16 %v278, %v276
      %v299 = vpack.c.b16 %v281, %v279
      %v300 = vpack.c.b16 %v282, %v280
      %v301 = vpack.c.b16 %v285, %v283
      %v302 = vpack.c.b16 %v286, %v284
      %v351 = vunpack.c.l.b16 %v195
      %v352 = vunpack.c.h.b16 %v195
      %v353 = vunpack.c.l.b16 %v196
      %v354 = vunpack.c.h.b16 %v196
      %v355 = vunpack.c.l.b16 %v197
      %v356 = vunpack.c.h.b16 %v197
      %v357 = vunpack.c.l.b16 %v198
      %v358 = vunpack.c.h.b16 %v198
      %v359 = vunpack.c.l.b16 %v199
      %v360 = vunpack.c.h.b16 %v199
      %v361 = vunpack.c.l.b16 %v200
      %v362 = vunpack.c.h.b16 %v200
      %v363 = vunpack.c.l.b16 %v201
      %v364 = vunpack.c.h.b16 %v201
      %v365 = vunpack.c.l.b16 %v202
      %v366 = vunpack.c.h.b16 %v202
      %v367 = vunpack.c.l.b16 %v203
      %v368 = vunpack.c.h.b16 %v203
      %v369 = vunpack.c.l.b16 %v204
      %v370 = vunpack.c.h.b16 %v204
      %v371 = vunpack.c.l.b16 %v205
      %v372 = vunpack.c.h.b16 %v205
      %v373 = vunpack.c.l.b16 %v206
      %v374 = vunpack.c.h.b16 %v206
      %v375 = vunpack.c.l.b16 %v207
      %v376 = vunpack.c.h.b16 %v207
      %v377 = vunpack.c.l.b16 %v208
      %v378 = vunpack.c.h.b16 %v208
      %v379 = vunpack.c.l.b16 %v209
      %v380 = vunpack.c.h.b16 %v209
      %v381 = vunpack.c.l.b16 %v210
      %v382 = vunpack.c.h.b16 %v210
      %v383 = vunpack.c.l.b16 %v211
      %v384 = vunpack.c.h.b16 %v211
      %v385 = vunpack.c.l.b16 %v212
      %v386 = vunpack.c.h.b16 %v212
      %v387 = vunpack.c.l.b16 %v213
      %v388 = vunpack.c.h.b16 %v213
      %v389 = vunpack.c.l.b16 %v214
      %v390 = vunpack.c.h.b16 %v214
      %v391 = vunpack.c.l.b16 %v215
      %v392 = vunpack.c.h.b16 %v215
      %v393 = vunpack.c.l.b16 %v216
      %v394 = vunpack.c.h.b16 %v216
      %v395 = vunpack.c.l.b16 %v217
      %v396 = vunpack.c.h.b16 %v217
      %v397 = vunpack.c.l.b16 %v218
      %v398 = vunpack.c.h.b16 %v218
      %v399 = vunpack.c.l.b16 %v219
      %v400 = vunpack.c.h.b16 %v219
      %v401 = vunpack.c.l.b16 %v220
      %v402 = vunpack.c.h.b16 %v220
      %v403 = vunpack.c.l.b16 %v221
      %v404 = vunpack.c.h.b16 %v221
      %v405 = vunpack.c.l.b16 %v222
      %v406 = vunpack.c.h.b16 %v222
      %v407 = vunpack.c.l.b16 %v223
      %v408 = vunpack.c.h.b16 %v223
      %v409 = vunpack.c.l.b16 %v224
      %v410 = vunpack.c.h.b16 %v224
      %v411 = vunpack.c.l.b16 %v225
      %v412 = vunpack.c.h.b16 %v225
      %v413 = vunpack.c.l.b16 %v226
      %v414 = vunpack.c.h.b16 %v226
      %v415 = vpack.c.b16 %v353, %v351
      %v416 = vpack.c.b16 %v354, %v352
      %v417 = vpack.c.b16 %v357, %v355
      %v418 = vpack.c.b16 %v358, %v356
      %v419 = vpack.c.b16 %v361, %v359
      %v420 = vpack.c.b16 %v362, %v360
      %v421 = vpack.c.b16 %v365, %v363
      %v422 = vpack.c.b16 %v366, %v364
      %v423 = vpack.c.b16 %v369, %v367
      %v424 = vpack.c.b16 %v370, %v368
      %v425 = vpack.c.b16 %v373, %v371
      %v426 = vpack.c.b16 %v374, %v372
      %v427 = vpack.c.b16 %v377, %v375
      %v428 = vpack.c.b16 %v378, %v376
      %v429 = vpack.c.b16 %v381, %v379
      %v430 = vpack.c.b16 %v382, %v380
      %v431 = vpack.c.b16 %v385, %v383
      %v432 = vpack.c.b16 %v386, %v384
      %v433 = vpack.c.b16 %v389, %v387
      %v434 = vpack.c.b16 %v390, %v388
      %v435 = vpack.c.b16 %v393, %v391
      %v436 = vpack.c.b16 %v394, %v392
      %v437 = vpack.c.b16 %v397, %v395
      %v438 = vpack.c.b16 %v398, %v396
      %v439 = vpack.c.b16 %v401, %v399
      %v440 = vpack.c.b16 %v402, %v400
      %v441 = vpack.c.b16 %v405, %v403
      %v442 = vpack.c.b16 %v406, %v404
      %v443 = vpack.c.b16 %v409, %v407
      %v444 = vpack.c.b16 %v410, %v408
      %v445 = vpack.c.b16 %v413, %v411
      %v446 = vpack.c.b16 %v414, %v412
      %479 = vmatprep.subr.bf16.mxu0 %v416
      %480 = vmatpush1.bf16.msra.mxu0 %v415
      %481 = vmatprep.subr.bf16.mxu0 %v418
      %482 = vmatpush1.bf16.msra.mxu0 %v417
      %483 = vmatprep.subr.bf16.mxu0 %v420
      %484 = vmatpush1.bf16.msra.mxu0 %v419
      %485 = vmatprep.subr.bf16.mxu0 %v422
      %486 = vmatpush1.bf16.msra.mxu0 %v421
      %487 = vmatprep.subr.bf16.mxu0 %v424
      %488 = vmatpush1.bf16.msra.mxu0 %v423
      %489 = vmatprep.subr.bf16.mxu0 %v426
      %490 = vmatpush1.bf16.msra.mxu0 %v425
      %491 = vmatprep.subr.bf16.mxu0 %v428
      %492 = vmatpush1.bf16.msra.mxu0 %v427
      %493 = vmatprep.subr.bf16.mxu0 %v430
      %494 = vmatpush1.bf16.msra.mxu0 %v429
      %495 = vmatprep.subr.bf16.mxu0 %v432
      %496 = vmatpush1.bf16.msra.mxu0 %v431
      %497 = vmatprep.subr.bf16.mxu0 %v434
      %498 = vmatpush1.bf16.msra.mxu0 %v433
      %499 = vmatprep.subr.bf16.mxu0 %v436
      %500 = vmatpush1.bf16.msra.mxu0 %v435
      %501 = vmatprep.subr.bf16.mxu0 %v438
      %502 = vmatpush1.bf16.msra.mxu0 %v437
      %503 = vmatprep.subr.bf16.mxu0 %v440
      %504 = vmatpush1.bf16.msra.mxu0 %v439
      %505 = vmatprep.subr.bf16.mxu0 %v442
      %506 = vmatpush1.bf16.msra.mxu0 %v441
      %507 = vmatprep.subr.bf16.mxu0 %v444
      %508 = vmatpush1.bf16.msra.mxu0 %v443
      %509 = vmatprep.subr.bf16.mxu0 %v446
      %510 = vmatpush1.bf16.msra.mxu0 %v445
      %511 = vmatprep.mubr.bf16.mxu0 %v288
      %512 = vmatmul.mubr.bf16.gmra.mrb[0].mxu0 %v287
      %v513 = vpop.f32.mrb[0].mxu0
      %v514 = vadd.f32 %v232, %v513
      %v515 = vpop.f32.mrb[0].mxu0
      %v516 = vadd.f32 %v236, %v515
      %v517 = vpop.f32.mrb[0].mxu0
      %v518 = vadd.f32 %v232, %v517
      %v519 = vpop.f32.mrb[0].mxu0
      %v520 = vadd.f32 %v236, %v519
      %521 = vmatprep.mubr.bf16.mxu0 %v290
      %522 = vmatmul.mubr.bf16.gmra.mrb[0].mxu0 %v289
      %v523 = vpop.f32.mrb[0].mxu0
      %v524 = vadd.f32 %v232, %v523
      %v525 = vpop.f32.mrb[0].mxu0
      %v526 = vadd.f32 %v236, %v525
      %v527 = vpop.f32.mrb[0].mxu0
      %v528 = vadd.f32 %v232, %v527
      %v529 = vpop.f32.mrb[0].mxu0
      %v530 = vadd.f32 %v236, %v529
      %531 = vmatprep.mubr.bf16.mxu0 %v292
      %532 = vmatmul.mubr.bf16.gmra.mrb[0].mxu0 %v291
      %v533 = vpop.f32.mrb[0].mxu0
      %v534 = vadd.f32 %v232, %v533
      %v535 = vpop.f32.mrb[0].mxu0
      %v536 = vadd.f32 %v236, %v535
      %v537 = vpop.f32.mrb[0].mxu0
      %v538 = vadd.f32 %v232, %v537
      %v539 = vpop.f32.mrb[0].mxu0
      %v540 = vadd.f32 %v236, %v539
      %541 = vmatprep.mubr.bf16.mxu0 %v294
      %542 = vmatmul.mubr.bf16.gmra.mrb[0].mxu0 %v293
      %v543 = vpop.f32.mrb[0].mxu0
      %v544 = vadd.f32 %v232, %v543
      %v545 = vpop.f32.mrb[0].mxu0
      %v546 = vadd.f32 %v236, %v545
      %v547 = vpop.f32.mrb[0].mxu0
      %v548 = vadd.f32 %v232, %v547
      %v549 = vpop.f32.mrb[0].mxu0
      %v550 = vadd.f32 %v236, %v549
      %551 = vmatprep.mubr.bf16.mxu0 %v296
      %552 = vmatmul.mubr.bf16.gmra.mrb[0].mxu0 %v295
      %v553 = vpop.f32.mrb[0].mxu0
      %v554 = vadd.f32 %v232, %v553
      %v555 = vpop.f32.mrb[0].mxu0
      %v556 = vadd.f32 %v236, %v555
      %v557 = vpop.f32.mrb[0].mxu0
      %v558 = vadd.f32 %v232, %v557
      %v559 = vpop.f32.mrb[0].mxu0
      %v560 = vadd.f32 %v236, %v559
      %561 = vmatprep.mubr.bf16.mxu0 %v298
      %562 = vmatmul.mubr.bf16.gmra.mrb[0].mxu0 %v297
      %v563 = vpop.f32.mrb[0].mxu0
      %v564 = vadd.f32 %v232, %v563
      %v565 = vpop.f32.mrb[0].mxu0
      %v566 = vadd.f32 %v236, %v565
      %v567 = vpop.f32.mrb[0].mxu0
      %v568 = vadd.f32 %v232, %v567
      %v569 = vpop.f32.mrb[0].mxu0
      %v570 = vadd.f32 %v236, %v569
      %571 = vmatprep.mubr.bf16.mxu0 %v300
      %572 = vmatmul.mubr.bf16.gmra.mrb[0].mxu0 %v299
      %v573 = vpop.f32.mrb[0].mxu0
      %v574 = vadd.f32 %v232, %v573
      %v575 = vpop.f32.mrb[0].mxu0
      %v576 = vadd.f32 %v236, %v575
      %v577 = vpop.f32.mrb[0].mxu0
      %v578 = vadd.f32 %v232, %v577
      %v579 = vpop.f32.mrb[0].mxu0
      %v580 = vadd.f32 %v236, %v579
      %581 = vmatprep.mubr.bf16.mxu0 %v302
      %582 = vmatmul.mubr.bf16.gmra.mrb[0].mxu0 %v301
      %v583 = vpop.f32.mrb[0].mxu0
      %v584 = vadd.f32 %v232, %v583
      %v585 = vpop.f32.mrb[0].mxu0
      %v586 = vadd.f32 %v236, %v585
      %v587 = vpop.f32.mrb[0].mxu0
      %v588 = vadd.f32 %v232, %v587
      %v589 = vpop.f32.mrb[0].mxu0
      %v590 = vadd.f32 %v236, %v589
      %591 = vdwg.mxu0
      %v592 = vmax.f32 %v514, 0.0
      %v593 = vmax.f32 %v516, 0.0
      %v594 = vmax.f32 %v518, 0.0
      %v595 = vmax.f32 %v520, 0.0
      %v596 = vmax.f32 %v524, 0.0
      %v597 = vmax.f32 %v526, 0.0
      %v598 = vmax.f32 %v528, 0.0
      %v599 = vmax.f32 %v530, 0.0
      %v600 = vmax.f32 %v534, 0.0
      %v601 = vmax.f32 %v536, 0.0
      %v602 = vmax.f32 %v538, 0.0
      %v603 = vmax.f32 %v540, 0.0
      %v604 = vmax.f32 %v544, 0.0
      %v605 = vmax.f32 %v546, 0.0
      %v606 = vmax.f32 %v548, 0.0
      %v607 = vmax.f32 %v550, 0.0
      %v608 = vmax.f32 %v554, 0.0
      %v609 = vmax.f32 %v556, 0.0
      %v610 = vmax.f32 %v558, 0.0
      %v611 = vmax.f32 %v560, 0.0
      %v612 = vmax.f32 %v564, 0.0
      %v613 = vmax.f32 %v566, 0.0
      %v614 = vmax.f32 %v568, 0.0
      %v615 = vmax.f32 %v570, 0.0
      %v616 = vmax.f32 %v574, 0.0
      %v617 = vmax.f32 %v576, 0.0
      %v618 = vmax.f32 %v578, 0.0
      %v619 = vmax.f32 %v580, 0.0
      %v620 = vmax.f32 %v584, 0.0
      %v621 = vmax.f32 %v586, 0.0
      %v622 = vmax.f32 %v588, 0.0
      %v623 = vmax.f32 %v590, 0.0
      %v624 = vpack.c.bf16 %v594, %v592
      %v625 = vpack.c.bf16 %v595, %v593
      %v626 = vpack.c.bf16 %v598, %v596
      %v627 = vpack.c.bf16 %v599, %v597
      %v628 = vpack.c.bf16 %v602, %v600
      %v629 = vpack.c.bf16 %v603, %v601
      %v630 = vpack.c.bf16 %v606, %v604
      %v631 = vpack.c.bf16 %v607, %v605
      %v632 = vpack.c.bf16 %v610, %v608
      %v633 = vpack.c.bf16 %v611, %v609
      %v634 = vpack.c.bf16 %v614, %v612
      %v635 = vpack.c.bf16 %v615, %v613
      %v636 = vpack.c.bf16 %v618, %v616
      %v637 = vpack.c.bf16 %v619, %v617
      %v638 = vpack.c.bf16 %v622, %v620
      %v639 = vpack.c.bf16 %v623, %v621
      %v656 = vunpack.c.l.b16 %v624
      %v657 = vunpack.c.l.b16 %v625
      %v658 = vunpack.c.h.b16 %v624
      %v659 = vunpack.c.h.b16 %v625
      %v660 = vunpack.c.l.b16 %v626
      %v661 = vunpack.c.l.b16 %v627
      %v662 = vunpack.c.h.b16 %v626
      %v663 = vunpack.c.h.b16 %v627
      %v664 = vunpack.c.l.b16 %v628
      %v665 = vunpack.c.l.b16 %v629
      %v666 = vunpack.c.h.b16 %v628
      %v667 = vunpack.c.h.b16 %v629
      %v668 = vunpack.c.l.b16 %v630
      %v669 = vunpack.c.l.b16 %v631
      %v670 = vunpack.c.h.b16 %v630
      %v671 = vunpack.c.h.b16 %v631
      %v672 = vunpack.c.l.b16 %v632
      %v673 = vunpack.c.l.b16 %v633
      %v674 = vunpack.c.h.b16 %v632
      %v675 = vunpack.c.h.b16 %v633
      %v676 = vunpack.c.l.b16 %v634
      %v677 = vunpack.c.l.b16 %v635
      %v678 = vunpack.c.h.b16 %v634
      %v679 = vunpack.c.h.b16 %v635
      %v680 = vunpack.c.l.b16 %v636
      %v681 = vunpack.c.l.b16 %v637
      %v682 = vunpack.c.h.b16 %v636
      %v683 = vunpack.c.h.b16 %v637
      %v684 = vunpack.c.l.b16 %v638
      %v685 = vunpack.c.l.b16 %v639
      %v686 = vunpack.c.h.b16 %v638
      %v687 = vunpack.c.h.b16 %v639
      %v688 = vpack.c.b16 %v657, %v656
      %v689 = vpack.c.b16 %v659, %v658
      %v690 = vpack.c.b16 %v661, %v660
      %v691 = vpack.c.b16 %v663, %v662
      %v692 = vpack.c.b16 %v665, %v664
      %v693 = vpack.c.b16 %v667, %v666
      %v694 = vpack.c.b16 %v669, %v668
      %v695 = vpack.c.b16 %v671, %v670
      %v696 = vpack.c.b16 %v673, %v672
      %v697 = vpack.c.b16 %v675, %v674
      %v698 = vpack.c.b16 %v677, %v676
      %v699 = vpack.c.b16 %v679, %v678
      %v700 = vpack.c.b16 %v681, %v680
      %v701 = vpack.c.b16 %v683, %v682
      %v702 = vpack.c.b16 %v685, %v684
      %v703 = vpack.c.b16 %v687, %v686
      %vm720 = vcmask 1043456
      %vm721 = vcmask 392196
      %vm722 = vmor %vm721, %vm720
      %723 = vst.msk [vmem:[%s177] sm:$0xff] %vm722, %v688
      %724 = vst.msk [vmem:[%s177 + $0x8] sm:$0xff] %vm722, %v689
      %725 = vst.msk [vmem:[%s177 + $0x10] sm:$0xff] %vm722, %v690
      %726 = vst.msk [vmem:[%s177 + $0x18] sm:$0xff] %vm722, %v691
      %727 = vst.msk [vmem:[%s177 + $0x20] sm:$0xff] %vm722, %v692
      %728 = vst.msk [vmem:[%s177 + $0x28] sm:$0xff] %vm722, %v693
      %729 = vst.msk [vmem:[%s177 + $0x30] sm:$0xff] %vm722, %v694
      %730 = vst.msk [vmem:[%s177 + $0x38] sm:$0xff] %vm722, %v695
      %731 = vst.msk [vmem:[%s177 + $0x40] sm:$0xff] %vm722, %v696
      %732 = vst.msk [vmem:[%s177 + $0x48] sm:$0xff] %vm722, %v697
      %733 = vst.msk [vmem:[%s177 + $0x50] sm:$0xff] %vm722, %v698
      %734 = vst.msk [vmem:[%s177 + $0x58] sm:$0xff] %vm722, %v699
      %735 = vst.msk [vmem:[%s177 + $0x60] sm:$0xff] %vm722, %v700
      %736 = vst.msk [vmem:[%s177 + $0x68] sm:$0xff] %vm722, %v701
      %737 = vst.msk [vmem:[%s177 + $0x70] sm:$0xff] %vm722, %v702
      %738 = vst.msk [vmem:[%s177 + $0x78] sm:$0xff] %vm722, %v703
      %s739 = smul.u32 16, %s14
      %p740 = scmp.lt.s32.totalorder %s739, 63
      %s741 = scalar_select %p740, %s739, 63
      %s742 = smul.addr %s741, 2
      %s743 = smul.addr %s742, 4
      %s744 = scalar_lea.vmem %s3, %s743
      // Predicated region
      $region33: #{inception4c_forward.3} parent=31 // pred_check
        %p745 = pneg %p100
      $region34: #{inception4c_forward.3} parent=31 // pred_check_branch
        %747 = sbr.rel (%p745) target = $region36
      $region35: #{inception4c_forward.3} parent=31 // pred_region
        %s748 = smul.u32 16, %s14
      $region36: #{inception4c_forward.3} parent=31 // pred_fallthru
        _
    $region32: #{inception4c_forward.3} parent=5 // pred_fallthru
      _
    %p749 = scmp.le.s32.totalorder 2, %s9
    // Predicated region
    $region37: #{inception4c_forward.3} parent=5 // pred_check
      %p750 = pneg %p749
    $region38: #{inception4c_forward.3} parent=5 // pred_check_branch
      %752 = sbr.rel (%p750) target = $region40
    $region39: #{inception4c_forward.3} parent=5 // pred_region
      %s753 = ssub.s32 %s9, 2
      // Predicated region
      $region41: #{inception4c_forward.3} parent=39 // pred_check
        %p754 = pneg %p106
      $region42: #{inception4c_forward.3} parent=39 // pred_check_branch
        %756 = sbr.rel (%p754) target = $region44
      $region43: #{inception4c_forward.3} parent=39 // pred_region
        %s757 = smul.u32 16, %s15
        %p758 = scmp.lt.s32.totalorder %s757, 63
        %s759 = scalar_select %p758, %s757, 63
        %s760 = smul.addr %s759, 2
        %s761 = smul.addr %s760, 4
        %s762 = scalar_lea.vmem %s3, %s761
      $region44: #{inception4c_forward.3} parent=39 // pred_fallthru
        _
    $region40: #{inception4c_forward.3} parent=5 // pred_fallthru
      _
  $region6: #{inception4c_forward.3} parent=0 // loop_footer
    %s13 = sadd.s32 1, %s9
  $region7: #{inception4c_forward.3} parent=0 // loop_footer_branch
    %8 = sbr.rel target = $region3
  $region8: #{inception4c_forward.3} parent=0 // loop_exit
    _

// kernel: inception4c_forward.4
$region0: #{inception4c_forward.4}
  #allocation0 [shape = 'u32[]', space=smem, size = 0x4, offset = 0x4, fixed_abs, tag = 'smem constant byte address 0x4 - core index']
  #allocation1 [shape = 'u32[144,128]{1,0:T(1,128)}', space=vmem, size = 0x12000, scoped, tag = 'internal scratch']
  %s0 = inlined_call_operand.vmem [shape: bf16[512,432], index: 0, kind: input, shape index: {}]
  %s1 = inlined_call_operand.vmem [shape: bf16[432,128], index: 1, kind: input, shape index: {}]
  %s2 = inlined_call_operand.vmem [shape: f32[1,128], index: 2, kind: input, shape index: {}]
  %s3 = inlined_call_operand.vmem [shape: bf16[512,128], index: 3, kind: output, shape index: {}]
  %s4 = sld [smem:[#allocation0]]
  $region45: #{inception4c_forward.4} parent=0
    _
  %s6 = ssub.s32 1, %s4
  %s7 = scalar_select 0, %s6, %s4
  loop: start=0, step=1, limit=6
  $region2: #{inception4c_forward.4} parent=0 // loop_pre_header
    _
  $region3: #{inception4c_forward.4} parent=0 // loop_header
    %s9 = sphi 0, %s13
    %p10 = scmp.ge.s32.totalorder %s9, 6
    %s19 = sphi 0, %s21
    %s22 = sphi 0, %s19
    %s23 = sphi 0, %s22
    %s39 = sphi 0, %s23
    %s43 = sphi 0, %s43
    %s45 = sphi 0, %s43
    %s46 = sphi 0, %s45
    %s60 = sphi 0, %s46
    %s64 = sphi 0, %s64
    %s66 = sphi 0, %s64
    %s67 = sphi 0, %s66
    %s81 = sphi 0, %s67
    %s87 = sphi 0, %s89
    %s90 = sphi 0, %s87
    %s91 = sphi 0, %s90
    %s107 = sphi 0, %s91
  $region4: #{inception4c_forward.4} parent=0 // loop_header_branch
    %12 = sbr.rel (%p10) target = $region8
  $region5: #{inception4c_forward.4} parent=0 // loop_body
    %s14 = ssub.s32 %s9, 1
    %s15 = ssub.s32 %s9, 2
    %s16 = sadd.s32 %s9, 1
    %s17 = ssub.s32 %s9, %s16
    %p18 = scmp.eq.s32.totalorder %s17, 0
    %s20 = sadd.s32 %s19, 1
    %s21 = scalar_select %p18, %s19, %s20
    %p24 = pneg %p18
    %p25 = scmp.eq.s32.totalorder %s9, 3
    %p26 = por %p24, %p25
    %p27 = scmp.ne.s32.totalorder %s19, %s22
    %p28 = scmp.eq.s32.totalorder %s9, 0
    %p29 = por %p27, %p28
    %p30 = scmp.ne.s32.totalorder %s19, %s22
    %p31 = scmp.eq.s32.totalorder %s14, 3
    %p32 = por %p30, %p31
    %p33 = scmp.ne.s32.totalorder %s22, %s23
    %p34 = scmp.eq.s32.totalorder %s14, 0
    %p35 = por %p33, %p34
    %p36 = scmp.ne.s32.totalorder %s22, %s23
    %p37 = scmp.eq.s32.totalorder %s15, 3
    %p38 = por %p36, %p37
    %p40 = scmp.ne.s32.totalorder %s23, %s39
    %p41 = scmp.eq.s32.totalorder %s15, 0
    %p42 = por %p40, %p41
    %s44 = sadd.s32 %s43, 1
    %p47 = scmp.eq.s32.totalorder %s9, 3
    %p48 = scmp.ne.s32.totalorder %s43, %s45
    %p49 = scmp.eq.s32.totalorder %s9, 0
    %p50 = por %p48, %p49
    %p51 = scmp.ne.s32.totalorder %s43, %s45
    %p52 = scmp.eq.s32.totalorder %s14, 3
    %p53 = por %p51, %p52
    %p54 = scmp.ne.s32.totalorder %s45, %s46
    %p55 = scmp.eq.s32.totalorder %s14, 0
    %p56 = por %p54, %p55
    %p57 = scmp.ne.s32.totalorder %s45, %s46
    %p58 = scmp.eq.s32.totalorder %s15, 3
    %p59 = por %p57, %p58
    %p61 = scmp.ne.s32.totalorder %s46, %s60
    %p62 = scmp.eq.s32.totalorder %s15, 0
    %p63 = por %p61, %p62
    %s65 = sadd.s32 %s64, 1
    %p68 = scmp.eq.s32.totalorder %s9, 3
    %p69 = scmp.ne.s32.totalorder %s64, %s66
    %p70 = scmp.eq.s32.totalorder %s9, 0
    %p71 = por %p69, %p70
    %p72 = scmp.ne.s32.totalorder %s64, %s66
    %p73 = scmp.eq.s32.totalorder %s14, 3
    %p74 = por %p72, %p73
    %p75 = scmp.ne.s32.totalorder %s66, %s67
    %p76 = scmp.eq.s32.totalorder %s14, 0
    %p77 = por %p75, %p76
    %p78 = scmp.ne.s32.totalorder %s66, %s67
    %p79 = scmp.eq.s32.totalorder %s15, 3
    %p80 = por %p78, %p79
    %p82 = scmp.ne.s32.totalorder %s67, %s81
    %p83 = scmp.eq.s32.totalorder %s15, 0
    %p84 = por %p82, %p83
    %s85 = ssub.s32 %s9, %s16
    %p86 = scmp.eq.s32.totalorder %s85, 0
    %s88 = sadd.s32 %s87, 1
    %s89 = scalar_select %p86, %s87, %s88
    %p92 = pneg %p86
    %p93 = scmp.eq.s32.totalorder %s9, 3
    %p94 = por %p92, %p93
    %p95 = scmp.ne.s32.totalorder %s87, %s90
    %p96 = scmp.eq.s32.totalorder %s9, 0
    %p97 = por %p95, %p96
    %p98 = scmp.ne.s32.totalorder %s87, %s90
    %p99 = scmp.eq.s32.totalorder %s14, 3
    %p100 = por %p98, %p99
    %p101 = scmp.ne.s32.totalorder %s90, %s91
    %p102 = scmp.eq.s32.totalorder %s14, 0
    %p103 = por %p101, %p102
    %p104 = scmp.ne.s32.totalorder %s90, %s91
    %p105 = scmp.eq.s32.totalorder %s15, 3
    %p106 = por %p104, %p105
    %p108 = scmp.ne.s32.totalorder %s91, %s107
    %p109 = scmp.eq.s32.totalorder %s15, 0
    %p110 = por %p108, %p109
    %p111 = scmp.le.s32.totalorder 1, %s9
    %p112 = scmp.lt.s32.totalorder %s9, 5
    %p113 = pnand %p111, %p112
    %p114 = pneg %p113
    // Predicated region
    $region9: #{inception4c_forward.4} parent=5 // pred_check
      _
    $region10: #{inception4c_forward.4} parent=5 // pred_check_branch
      %116 = sbr.rel (%p113) target = $region12
    $region11: #{inception4c_forward.4} parent=5 // pred_region
      %s117 = ssub.s32 %s9, 1
      // Predicated region
      $region13: #{inception4c_forward.4} parent=11 // pred_check
        %p118 = pneg %p56
      $region14: #{inception4c_forward.4} parent=11 // pred_check_branch
        %120 = sbr.rel (%p118) target = $region16
      $region15: #{inception4c_forward.4} parent=11 // pred_region
        _
      $region16: #{inception4c_forward.4} parent=11 // pred_fallthru
        _
      // Predicated region
      $region17: #{inception4c_forward.4} parent=11 // pred_check
        %p121 = pneg %p77
      $region18: #{inception4c_forward.4} parent=11 // pred_check_branch
        %123 = sbr.rel (%p121) target = $region20
      $region19: #{inception4c_forward.4} parent=11 // pred_region
        _
      $region20: #{inception4c_forward.4} parent=11 // pred_fallthru
        _
    $region12: #{inception4c_forward.4} parent=5 // pred_fallthru
      _
    %p124 = scmp.lt.s32.totalorder %s9, 4
    // Predicated region
    $region21: #{inception4c_forward.4} parent=5 // pred_check
      %p125 = pneg %p124
    $region22: #{inception4c_forward.4} parent=5 // pred_check_branch
      %127 = sbr.rel (%p125) target = $region24
    $region23: #{inception4c_forward.4} parent=5 // pred_region
      // Predicated region
      $region25: #{inception4c_forward.4} parent=23 // pred_check
        %p128 = pneg %p29
      $region26: #{inception4c_forward.4} parent=23 // pred_check_branch
        %130 = sbr.rel (%p128) target = $region28
      $region27: #{inception4c_forward.4} parent=23 // pred_region
        %s131 = smul.u32 16, %s9
        %p132 = scmp.lt.s32.totalorder %s131, 63
        %s133 = scalar_select %p132, %s131, 63
        %s134 = smul.addr %s133, 4
        %s135 = smul.addr %s134, 4
        %s136 = scalar_lea.vmem %s0, %s135
        %s137 = smul.u32 16, %s9
      $region28: #{inception4c_forward.4} parent=23 // pred_fallthru
        _
    $region24: #{inception4c_forward.4} parent=5 // pred_fallthru
      _
    %p138 = scmp.le.s32.totalorder 1, %s9
    %p139 = scmp.lt.s32.totalorder %s9, 5
    %p140 = pnand %p138, %p139
    %p141 = pneg %p140
    // Predicated region
    $region29: #{inception4c_forward.4} parent=5 // pred_check
      _
    $region30: #{inception4c_forward.4} parent=5 // pred_check_branch
      %143 = sbr.rel (%p140) target = $region32
    $region31: #{inception4c_forward.4} parent=5 // pred_region
      %s144 = ssub.s32 %s9, 1
      %s145 = smul.u32 16, %s14
      %p146 = scmp.lt.s32.totalorder %s145, 63
      %s147 = scalar_select %p146, %s145, 63
      %s148 = smul.addr %s147, 4
      %s149 = smul.addr %s148, 4
      %s150 = scalar_lea.vmem %s0, %s149
      %p151 = pneg %p35
      %p152 = pneg %p32
      %p153 = pneg %p56
      %p154 = pneg %p53
      %p155 = pneg %p77
      %p156 = pneg %p74
      %p157 = pneg %p103
      %p158 = pneg %p100
      %s159 = smul.u32 16, %s14
      %p160 = scmp.lt.s32.totalorder %s159, 63
      %s161 = scalar_select %p160, %s159, 63
      %s162 = smul.addr %s161, 4
      %s163 = scalar_lea.vmem %s3, %s162
      %s164 = smul.u32 16, %s14
      %p165 = scmp.lt.s32.totalorder %s164, 63
      %s166 = scalar_select %p165, %s164, 63
      %s167 = smul.addr %s166, 4
      %s168 = smul.addr %s167, 4
      %s169 = scalar_lea.vmem %s0, %s168
      %s170 = smul.u32 16, %s14
      %s171 = smul.u32 16, %s14
      %p172 = scmp.lt.s32.totalorder %s171, 63
      %s173 = scalar_select %p172, %s171, 63
      %s174 = smul.addr %s173, 4
      %s175 = scalar_lea.vmem %s3, %s174
      %s176 = smul.u32 16, %s14
      %v178 = vld [vmem:[%s169] sm:$0xff]
      %v179 = vld [vmem:[%s169 + $0x8] sm:$0xff]
      %v180 = vld [vmem:[%s169 + $0x10] sm:$0xff]
      %v181 = vld [vmem:[%s169 + $0x18] sm:$0xff]
      %v182 = vld [vmem:[%s169 + $0x20] sm:$0xff]
      %v183 = vld [vmem:[%s169 + $0x28] sm:$0xff]
      %v184 = vld [vmem:[%s169 + $0x30] sm:$0xff]
      %v185 = vld [vmem:[%s169 + $0x38] sm:$0xff]
      %v186 = vld [vmem:[%s169 + $0x40] sm:$0xff]
      %v187 = vld [vmem:[%s169 + $0x48] sm:$0xff]
      %v188 = vld [vmem:[%s169 + $0x50] sm:$0xff]
      %v189 = vld [vmem:[%s169 + $0x58] sm:$0xff]
      %v190 = vld [vmem:[%s169 + $0x60] sm:$0xff]
      %v191 = vld [vmem:[%s169 + $0x68] sm:$0xff]
      %v192 = vld [vmem:[%s169 + $0x70] sm:$0xff]
      %v193 = vld [vmem:[%s169 + $0x78] sm:$0xff]
      %v194 = vld [vmem:[%s169 + $0x80] sm:$0xff]
      %v195 = vld [vmem:[%s169 + $0x88] sm:$0xff]
      %v196 = vld [vmem:[%s169 + $0x90] sm:$0xff]
      %v197 = vld [vmem:[%s169 + $0x98] sm:$0xff]
      %v198 = vld [vmem:[%s169 + $0xa0] sm:$0xff]
      %v199 = vld [vmem:[%s169 + $0xa8] sm:$0xff]
      %v200 = vld [vmem:[%s169 + $0xb0] sm:$0xff]
      %v201 = vld [vmem:[%s169 + $0xb8] sm:$0xff]
      %v202 = vld [vmem:[%s169 + $0xc0] sm:$0xff]
      %v203 = vld [vmem:[%s169 + $0xc8] sm:$0xff]
      %v204 = vld [vmem:[%s169 + $0xd0] sm:$0xff]
      %v205 = vld [vmem:[%s169 + $0xd8] sm:$0xff]
      %v206 = vld [vmem:[%s169 + $0xe0] sm:$0xff]
      %v207 = vld [vmem:[%s169 + $0xe8] sm:$0xff]
      %v208 = vld [vmem:[%s169 + $0xf0] sm:$0xff]
      %v209 = vld [vmem:[%s169 + $0xf8] sm:$0xff]
      %v210 = vld [vmem:[%s1] sm:$0xf]
      %v211 = vld [vmem:[%s1 + $0x4] sm:$0xf]
      %v212 = vld [vmem:[%s1 + $0x8] sm:$0xf]
      %v213 = vld [vmem:[%s1 + $0xc] sm:$0xf]
      %v214 = vld [vmem:[%s1 + $0x10] sm:$0xf]
      %v215 = vld [vmem:[%s1 + $0x14] sm:$0xf]
      %v216 = vld [vmem:[%s1 + $0x18] sm:$0xf]
      %v217 = vld [vmem:[%s1 + $0x1c] sm:$0xf]
      %v218 = vld [vmem:[%s1 + $0x20] sm:$0xf]
      %v219 = vld [vmem:[%s1 + $0x24] sm:$0xf]
      %v220 = vld [vmem:[%s1 + $0x28] sm:$0xf]
      %v221 = vld [vmem:[%s1 + $0x2c] sm:$0xf]
      %v222 = vld [vmem:[%s1 + $0x30] sm:$0xf]
      %v223 = vld [vmem:[%s1 + $0x34] sm:$0xf]
      %v224 = vld [vmem:[%s1 + $0x38] sm:$0xf]
      %v225 = vld [vmem:[%s1 + $0x3c] sm:$0xf]
      %v226 = vld [vmem:[%s1 + $0x40] sm:$0xf]
      %v227 = vld [vmem:[%s1 + $0x44] sm:$0xf]
      %v228 = vld [vmem:[%s1 + $0x48] sm:$0xf]
      %v229 = vld [vmem:[%s1 + $0x4c] sm:$0xf]
      %v230 = vld [vmem:[%s1 + $0x50] sm:$0xf]
      %v231 = vld [vmem:[%s1 + $0x54] sm:$0xf]
      %v232 = vld [vmem:[%s1 + $0x58] sm:$0xf]
      %v233 = vld [vmem:[%s1 + $0x5c] sm:$0xf]
      %v234 = vld [vmem:[%s1 + $0x60] sm:$0xf]
      %v235 = vld [vmem:[%s1 + $0x64] sm:$0xf]
      %v236 = vld [vmem:[%s1 + $0x68] sm:$0xf]
      %v237 = vld [vmem:[%s1 + $0x6c] sm:$0xf]
      %v238 = vld [vmem:[%s1 + $0x70] sm:$0xf]
      %v239 = vld [vmem:[%s1 + $0x74] sm:$0xf]
      %v240 = vld [vmem:[%s1 + $0x78] sm:$0xf]
      %v241 = vld [vmem:[%s1 + $0x7c] sm:$0xf]
      %v242 = vld [vmem:[%s1 + $0x80] sm:$0xf]
      %v243 = vld [vmem:[%s1 + $0x84] sm:$0xf]
      %v244 = vld [vmem:[%s1 + $0x88] sm:$0xf]
      %v245 = vld [vmem:[%s1 + $0x8c] sm:$0xf]
      %v246 = vld [vmem:[%s1 + $0x90] sm:$0xf]
      %v247 = vld [vmem:[%s1 + $0x94] sm:$0xf]
      %v248 = vld [vmem:[%s1 + $0x98] sm:$0xf]
      %v249 = vld [vmem:[%s1 + $0x9c] sm:$0xf]
      %v250 = vld [vmem:[%s1 + $0xa0] sm:$0xf]
      %v251 = vld [vmem:[%s1 + $0xa4] sm:$0xf]
      %v252 = vld [vmem:[%s1 + $0xa8] sm:$0xf]
      %v253 = vld [vmem:[%s1 + $0xac] sm:$0xf]
      %v254 = vld [vmem:[%s1 + $0xb0] sm:$0xf]
      %v255 = vld [vmem:[%s1 + $0xb4] sm:$0xf]
      %v256 = vld [vmem:[%s1 + $0xb8] sm:$0xf]
      %v257 = vld [vmem:[%s1 + $0xbc] sm:$0xf]
      %v258 = vld [vmem:[%s1 + $0xc0] sm:$0xf]
      %v259 = vld [vmem:[%s1 + $0xc4] sm:$0xf]
      %v260 = vld [vmem:[%s1 + $0xc8] sm:$0xf]
      %v261 = vld [vmem:[%s1 + $0xcc] sm:$0xf]
      %v262 = vld [vmem:[%s1 + $0xd0] sm:$0xf]
      %v263 = vld [vmem:[%s1 + $0xd4] sm:$0xf]
      %v264 = vld [vmem:[%s2] sm:$0x1]
      %v266 = vlaneseq
      %v267 = vshrl.u32 %v266, 7
      %v268 = vsub.s32 0, %v267
      %v269 = vrot.slane %v264, %v268
      %v303 = vunpack.c.l.b16 %v178
      %v304 = vunpack.c.h.b16 %v178
      %v305 = vunpack.c.l.b16 %v179
      %v306 = vunpack.c.h.b16 %v179
      %v307 = vunpack.c.l.b16 %v180
      %v308 = vunpack.c.h.b16 %v180
      %v309 = vunpack.c.l.b16 %v181
      %v310 = vunpack.c.h.b16 %v181
      %v311 = vunpack.c.l.b16 %v182
      %v312 = vunpack.c.h.b16 %v182
      %v313 = vunpack.c.l.b16 %v183
      %v314 = vunpack.c.h.b16 %v183
      %v315 = vunpack.c.l.b16 %v184
      %v316 = vunpack.c.h.b16 %v184
      %v317 = vunpack.c.l.b16 %v185
      %v318 = vunpack.c.h.b16 %v185
      %v319 = vunpack.c.l.b16 %v186
      %v320 = vunpack.c.h.b16 %v186
      %v321 = vunpack.c.l.b16 %v187
      %v322 = vunpack.c.h.b16 %v187
      %v323 = vunpack.c.l.b16 %v188
      %v324 = vunpack.c.h.b16 %v188
      %v325 = vunpack.c.l.b16 %v189
      %v326 = vunpack.c.h.b16 %v189
      %v327 = vunpack.c.l.b16 %v190
      %v328 = vunpack.c.h.b16 %v190
      %v329 = vunpack.c.l.b16 %v191
      %v330 = vunpack.c.h.b16 %v191
      %v331 = vunpack.c.l.b16 %v192
      %v332 = vunpack.c.h.b16 %v192
      %v333 = vunpack.c.l.b16 %v193
      %v334 = vunpack.c.h.b16 %v193
      %v335 = vunpack.c.l.b16 %v194
      %v336 = vunpack.c.h.b16 %v194
      %v337 = vunpack.c.l.b16 %v195
      %v338 = vunpack.c.h.b16 %v195
      %v339 = vunpack.c.l.b16 %v196
      %v340 = vunpack.c.h.b16 %v196
      %v341 = vunpack.c.l.b16 %v197
      %v342 = vunpack.c.h.b16 %v197
      %v343 = vunpack.c.l.b16 %v198
      %v344 = vunpack.c.h.b16 %v198
      %v345 = vunpack.c.l.b16 %v199
      %v346 = vunpack.c.h.b16 %v199
      %v347 = vunpack.c.l.b16 %v200
      %v348 = vunpack.c.h.b16 %v200
      %v349 = vunpack.c.l.b16 %v201
      %v350 = vunpack.c.h.b16 %v201
      %v351 = vunpack.c.l.b16 %v202
      %v352 = vunpack.c.h.b16 %v202
      %v353 = vunpack.c.l.b16 %v203
      %v354 = vunpack.c.h.b16 %v203
      %v355 = vunpack.c.l.b16 %v204
      %v356 = vunpack.c.h.b16 %v204
      %v357 = vunpack.c.l.b16 %v205
      %v358 = vunpack.c.h.b16 %v205
      %v359 = vunpack.c.l.b16 %v206
      %v360 = vunpack.c.h.b16 %v206
      %v361 = vunpack.c.l.b16 %v207
      %v362 = vunpack.c.h.b16 %v207
      %v363 = vunpack.c.l.b16 %v208
      %v364 = vunpack.c.h.b16 %v208
      %v365 = vunpack.c.l.b16 %v209
      %v366 = vunpack.c.h.b16 %v209
      %v367 = vpack.c.b16 %v307, %v303
      %v368 = vpack.c.b16 %v308, %v304
      %v369 = vpack.c.b16 %v309, %v305
      %v370 = vpack.c.b16 %v310, %v306
      %v371 = vpack.c.b16 %v315, %v311
      %v372 = vpack.c.b16 %v316, %v312
      %v373 = vpack.c.b16 %v317, %v313
      %v374 = vpack.c.b16 %v318, %v314
      %v375 = vpack.c.b16 %v323, %v319
      %v376 = vpack.c.b16 %v324, %v320
      %v377 = vpack.c.b16 %v325, %v321
      %v378 = vpack.c.b16 %v326, %v322
      %v379 = vpack.c.b16 %v331, %v327
      %v380 = vpack.c.b16 %v332, %v328
      %v381 = vpack.c.b16 %v333, %v329
      %v382 = vpack.c.b16 %v334, %v330
      %v383 = vpack.c.b16 %v339, %v335
      %v384 = vpack.c.b16 %v340, %v336
      %v385 = vpack.c.b16 %v341, %v337
      %v386 = vpack.c.b16 %v342, %v338
      %v387 = vpack.c.b16 %v347, %v343
      %v388 = vpack.c.b16 %v348, %v344
      %v389 = vpack.c.b16 %v349, %v345
      %v390 = vpack.c.b16 %v350, %v346
      %v391 = vpack.c.b16 %v355, %v351
      %v392 = vpack.c.b16 %v356, %v352
      %v393 = vpack.c.b16 %v357, %v353
      %v394 = vpack.c.b16 %v358, %v354
      %v395 = vpack.c.b16 %v363, %v359
      %v396 = vpack.c.b16 %v364, %v360
      %v397 = vpack.c.b16 %v365, %v361
      %v398 = vpack.c.b16 %v366, %v362
      %v477 = vunpack.c.l.b16 %v210
      %v478 = vunpack.c.l.b16 %v211
      %v479 = vunpack.c.l.b16 %v212
      %v480 = vunpack.c.l.b16 %v213
      %v481 = vunpack.c.l.b16 %v214
      %v482 = vunpack.c.l.b16 %v215
      %v483 = vunpack.c.l.b16 %v216
      %v484 = vunpack.c.l.b16 %v217
      %v485 = vunpack.c.l.b16 %v218
      %v486 = vunpack.c.l.b16 %v219
      %v487 = vunpack.c.l.b16 %v220
      %v488 = vunpack.c.l.b16 %v221
      %v489 = vunpack.c.l.b16 %v222
      %v490 = vunpack.c.l.b16 %v223
      %v491 = vunpack.c.l.b16 %v224
      %v492 = vunpack.c.l.b16 %v225
      %v493 = vunpack.c.l.b16 %v226
      %v494 = vunpack.c.l.b16 %v227
      %v495 = vunpack.c.l.b16 %v228
      %v496 = vunpack.c.l.b16 %v229
      %v497 = vunpack.c.l.b16 %v230
      %v498 = vunpack.c.l.b16 %v231
      %v499 = vunpack.c.l.b16 %v232
      %v500 = vunpack.c.l.b16 %v233
      %v501 = vunpack.c.l.b16 %v234
      %v502 = vunpack.c.l.b16 %v235
      %v503 = vunpack.c.l.b16 %v236
      %v504 = vunpack.c.l.b16 %v237
      %v505 = vunpack.c.l.b16 %v238
      %v506 = vunpack.c.l.b16 %v239
      %v507 = vunpack.c.l.b16 %v240
      %v508 = vunpack.c.l.b16 %v241
      %v509 = vunpack.c.l.b16 %v242
      %v510 = vunpack.c.l.b16 %v243
      %v511 = vunpack.c.l.b16 %v244
      %v512 = vunpack.c.l.b16 %v245
      %v513 = vunpack.c.l.b16 %v246
      %v514 = vunpack.c.l.b16 %v247
      %v515 = vunpack.c.l.b16 %v248
      %v516 = vunpack.c.l.b16 %v249
      %v517 = vunpack.c.l.b16 %v250
      %v518 = vunpack.c.l.b16 %v251
      %v519 = vunpack.c.l.b16 %v252
      %v520 = vunpack.c.l.b16 %v253
      %v521 = vunpack.c.l.b16 %v254
      %v522 = vunpack.c.l.b16 %v255
      %v523 = vunpack.c.l.b16 %v256
      %v524 = vunpack.c.l.b16 %v257
      %v525 = vunpack.c.l.b16 %v258
      %v526 = vunpack.c.l.b16 %v259
      %v527 = vunpack.c.l.b16 %v260
      %v528 = vunpack.c.l.b16 %v261
      %v529 = vunpack.c.l.b16 %v262
      %v530 = vunpack.c.l.b16 %v263
      %v531 = vpack.c.b16 %v478, %v477
      %v532 = vpack.c.b16 %v480, %v479
      %v533 = vpack.c.b16 %v482, %v481
      %v534 = vpack.c.b16 %v484, %v483
      %v535 = vpack.c.b16 %v486, %v485
      %v536 = vpack.c.b16 %v488, %v487
      %v537 = vpack.c.b16 %v490, %v489
      %v538 = vpack.c.b16 %v492, %v491
      %v539 = vpack.c.b16 %v494, %v493
      %v540 = vpack.c.b16 %v496, %v495
      %v541 = vpack.c.b16 %v498, %v497
      %v542 = vpack.c.b16 %v500, %v499
      %v543 = vpack.c.b16 %v502, %v501
      %v544 = vpack.c.b16 %v504, %v503
      %v545 = vpack.c.b16 %v506, %v505
      %v546 = vpack.c.b16 %v508, %v507
      %v547 = vpack.c.b16 %v510, %v509
      %v548 = vpack.c.b16 %v512, %v511
      %v549 = vpack.c.b16 %v514, %v513
      %v550 = vpack.c.b16 %v516, %v515
      %v551 = vpack.c.b16 %v518, %v517
      %v552 = vpack.c.b16 %v520, %v519
      %v553 = vpack.c.b16 %v522, %v521
      %v554 = vpack.c.b16 %v524, %v523
      %v555 = vpack.c.b16 %v526, %v525
      %v556 = vpack.c.b16 %v528, %v527
      %v557 = vpack.c.b16 %v530, %v529
      %vm585 = vcmask 392192
      %v587 = vsel %vm585, %v370, 0
      %v590 = vsel %vm585, %v374, 0
      %v593 = vsel %vm585, %v378, 0
      %v596 = vsel %vm585, %v382, 0
      %v599 = vsel %vm585, %v386, 0
      %v602 = vsel %vm585, %v390, 0
      %v605 = vsel %vm585, %v394, 0
      %v608 = vsel %vm585, %v398, 0
      %610 = vmatprep.subr.bf16.mxu0 0
      %611 = vmatpush1.bf16.msra.mxu0 %v531
      %612 = vmatprep.subr.bf16.mxu0 0
      %613 = vmatpush1.bf16.msra.mxu0 %v532
      %614 = vmatprep.subr.bf16.mxu0 0
      %615 = vmatpush1.bf16.msra.mxu0 %v533
      %616 = vmatprep.subr.bf16.mxu0 0
      %617 = vmatpush1.bf16.msra.mxu0 %v534
      %618 = vmatprep.subr.bf16.mxu0 0
      %619 = vmatpush1.bf16.msra.mxu0 %v535
      %620 = vmatprep.subr.bf16.mxu0 0
      %621 = vmatpush1.bf16.msra.mxu0 %v536
      %622 = vmatprep.subr.bf16.mxu0 0
      %623 = vmatpush1.bf16.msra.mxu0 %v537
      %624 = vmatprep.subr.bf16.mxu0 0
      %625 = vmatpush1.bf16.msra.mxu0 %v538
      %626 = vmatprep.subr.bf16.mxu0 0
      %627 = vmatpush1.bf16.msra.mxu0 %v539
      %628 = vmatprep.subr.bf16.mxu0 0
      %629 = vmatpush1.bf16.msra.mxu0 %v540
      %630 = vmatprep.subr.bf16.mxu0 0
      %631 = vmatpush1.bf16.msra.mxu0 %v541
      %632 = vmatprep.subr.bf16.mxu0 0
      %633 = vmatpush1.bf16.msra.mxu0 %v542
      %634 = vmatprep.subr.bf16.mxu0 0
      %635 = vmatpush1.bf16.msra.mxu0 %v543
      %636 = vmatprep.subr.bf16.mxu0 0
      %637 = vmatpush1.bf16.msra.mxu0 %v544
      %638 = vmatprep.subr.bf16.mxu0 0
      %639 = vmatpush1.bf16.msra.mxu0 %v545
      %640 = vmatprep.subr.bf16.mxu0 0
      %641 = vmatpush1.bf16.msra.mxu0 %v546
      %642 = vmatprep.mubr.bf16.mxu0 %v368
      %643 = vmatmul.mubr.bf16.gmra.mrb[0].mxu0 %v367
      %v644 = vpop.f32.mrb[0].mxu0
      %v645 = vadd.f32 %v269, %v644
      %v646 = vpop.f32.mrb[0].mxu0
      %v647 = vpop.f32.mrb[0].mxu0
      %v648 = vadd.f32 %v269, %v647
      %v649 = vpop.f32.mrb[0].mxu0
      %650 = vmatprep.mubr.bf16.mxu0 %v372
      %651 = vmatmul.mubr.bf16.gmra.mrb[0].mxu0 %v371
      %v652 = vpop.f32.mrb[0].mxu0
      %v653 = vadd.f32 %v269, %v652
      %v654 = vpop.f32.mrb[0].mxu0
      %v655 = vpop.f32.mrb[0].mxu0
      %v656 = vadd.f32 %v269, %v655
      %v657 = vpop.f32.mrb[0].mxu0
      %658 = vmatprep.mubr.bf16.mxu0 %v376
      %659 = vmatmul.mubr.bf16.gmra.mrb[0].mxu0 %v375
      %v660 = vpop.f32.mrb[0].mxu0
      %v661 = vadd.f32 %v269, %v660
      %v662 = vpop.f32.mrb[0].mxu0
      %v663 = vpop.f32.mrb[0].mxu0
      %v664 = vadd.f32 %v269, %v663
      %v665 = vpop.f32.mrb[0].mxu0
      %666 = vmatprep.mubr.bf16.mxu0 %v380
      %667 = vmatmul.mubr.bf16.gmra.mrb[0].mxu0 %v379
      %v668 = vpop.f32.mrb[0].mxu0
      %v669 = vadd.f32 %v269, %v668
      %v670 = vpop.f32.mrb[0].mxu0
      %v671 = vpop.f32.mrb[0].mxu0
      %v672 = vadd.f32 %v269, %v671
      %v673 = vpop.f32.mrb[0].mxu0
      %674 = vmatprep.mubr.bf16.mxu0 %v384
      %675 = vmatmul.mubr.bf16.gmra.mrb[0].mxu0 %v383
      %v676 = vpop.f32.mrb[0].mxu0
      %v677 = vadd.f32 %v269, %v676
      %v678 = vpop.f32.mrb[0].mxu0
      %v679 = vpop.f32.mrb[0].mxu0
      %v680 = vadd.f32 %v269, %v679
      %v681 = vpop.f32.mrb[0].mxu0
      %682 = vmatprep.mubr.bf16.mxu0 %v388
      %683 = vmatmul.mubr.bf16.gmra.mrb[0].mxu0 %v387
      %v684 = vpop.f32.mrb[0].mxu0
      %v685 = vadd.f32 %v269, %v684
      %v686 = vpop.f32.mrb[0].mxu0
      %v687 = vpop.f32.mrb[0].mxu0
      %v688 = vadd.f32 %v269, %v687
      %v689 = vpop.f32.mrb[0].mxu0
      %690 = vmatprep.mubr.bf16.mxu0 %v392
      %691 = vmatmul.mubr.bf16.gmra.mrb[0].mxu0 %v391
      %v692 = vpop.f32.mrb[0].mxu0
      %v693 = vadd.f32 %v269, %v692
      %v694 = vpop.f32.mrb[0].mxu0
      %v695 = vpop.f32.mrb[0].mxu0
      %v696 = vadd.f32 %v269, %v695
      %v697 = vpop.f32.mrb[0].mxu0
      %698 = vmatprep.mubr.bf16.mxu0 %v396
      %699 = vmatmul.mubr.bf16.gmra.mrb[0].mxu0 %v395
      %v700 = vpop.f32.mrb[0].mxu0
      %v701 = vadd.f32 %v269, %v700
      %v702 = vpop.f32.mrb[0].mxu0
      %v703 = vpop.f32.mrb[0].mxu0
      %v704 = vadd.f32 %v269, %v703
      %v705 = vpop.f32.mrb[0].mxu0
      %706 = vdwg.mxu0
      %707 = vmatprep.subr.bf16.mxu0 0
      %708 = vmatpush1.bf16.msra.mxu0 %v547
      %709 = vmatprep.subr.bf16.mxu0 0
      %710 = vmatpush1.bf16.msra.mxu0 %v548
      %711 = vmatprep.subr.bf16.mxu0 0
      %712 = vmatpush1.bf16.msra.mxu0 %v549
      %713 = vmatprep.subr.bf16.mxu0 0
      %714 = vmatpush1.bf16.msra.mxu0 %v550
      %715 = vmatprep.subr.bf16.mxu0 0
      %716 = vmatpush1.bf16.msra.mxu0 %v551
      %717 = vmatprep.subr.bf16.mxu0 0
      %718 = vmatpush1.bf16.msra.mxu0 %v552
      %719 = vmatprep.subr.bf16.mxu0 0
      %720 = vmatpush1.bf16.msra.mxu0 %v553
      %721 = vmatprep.subr.bf16.mxu0 0
      %722 = vmatpush1.bf16.msra.mxu0 %v554
      %723 = vmatprep.subr.bf16.mxu0 0
      %724 = vmatpush1.bf16.msra.mxu0 %v555
      %725 = vmatprep.subr.bf16.mxu0 0
      %726 = vmatpush1.bf16.msra.mxu0 %v556
      %727 = vmatprep.subr.bf16.mxu0 0
      %728 = vmatpush1.bf16.msra.mxu0 %v557
      %729 = vmatprep.subr.bf16.mxu0 0
      %730 = vmatpush1.bf16.msra.mxu0 0
      %731 = vmatprep.subr.bf16.mxu0 0
      %732 = vmatpush1.bf16.msra.mxu0 0
      %733 = vmatprep.subr.bf16.mxu0 0
      %734 = vmatpush1.bf16.msra.mxu0 0
      %735 = vmatprep.subr.bf16.mxu0 0
      %736 = vmatpush1.bf16.msra.mxu0 0
      %737 = vmatprep.subr.bf16.mxu0 0
      %738 = vmatpush1.bf16.msra.mxu0 0
      %739 = vmatprep.mubr.bf16.mxu0 %v587
      %740 = vmatmul.mubr.bf16.gmra.mrb[0].mxu0 %v369
      %v741 = vpop.f32.mrb[0].mxu0
      %v742 = vadd.f32 %v645, %v741
      %v743 = vpop.f32.mrb[0].mxu0
      %v744 = vpop.f32.mrb[0].mxu0
      %v745 = vadd.f32 %v648, %v744
      %v746 = vpop.f32.mrb[0].mxu0
      %747 = vmatprep.mubr.bf16.mxu0 %v590
      %748 = vmatmul.mubr.bf16.gmra.mrb[0].mxu0 %v373
      %v749 = vpop.f32.mrb[0].mxu0
      %v750 = vadd.f32 %v653, %v749
      %v751 = vpop.f32.mrb[0].mxu0
      %v752 = vpop.f32.mrb[0].mxu0
      %v753 = vadd.f32 %v656, %v752
      %v754 = vpop.f32.mrb[0].mxu0
      %755 = vmatprep.mubr.bf16.mxu0 %v593
      %756 = vmatmul.mubr.bf16.gmra.mrb[0].mxu0 %v377
      %v757 = vpop.f32.mrb[0].mxu0
      %v758 = vadd.f32 %v661, %v757
      %v759 = vpop.f32.mrb[0].mxu0
      %v760 = vpop.f32.mrb[0].mxu0
      %v761 = vadd.f32 %v664, %v760
      %v762 = vpop.f32.mrb[0].mxu0
      %763 = vmatprep.mubr.bf16.mxu0 %v596
      %764 = vmatmul.mubr.bf16.gmra.mrb[0].mxu0 %v381
      %v765 = vpop.f32.mrb[0].mxu0
      %v766 = vadd.f32 %v669, %v765
      %v767 = vpop.f32.mrb[0].mxu0
      %v768 = vpop.f32.mrb[0].mxu0
      %v769 = vadd.f32 %v672, %v768
      %v770 = vpop.f32.mrb[0].mxu0
      %771 = vmatprep.mubr.bf16.mxu0 %v599
      %772 = vmatmul.mubr.bf16.gmra.mrb[0].mxu0 %v385
      %v773 = vpop.f32.mrb[0].mxu0
      %v774 = vadd.f32 %v677, %v773
      %v775 = vpop.f32.mrb[0].mxu0
      %v776 = vpop.f32.mrb[0].mxu0
      %v777 = vadd.f32 %v680, %v776
      %v778 = vpop.f32.mrb[0].mxu0
      %779 = vmatprep.mubr.bf16.mxu0 %v602
      %780 = vmatmul.mubr.bf16.gmra.mrb[0].mxu0 %v389
      %v781 = vpop.f32.mrb[0].mxu0
      %v782 = vadd.f32 %v685, %v781
      %v783 = vpop.f32.mrb[0].mxu0
      %v784 = vpop.f32.mrb[0].mxu0
      %v785 = vadd.f32 %v688, %v784
      %v786 = vpop.f32.mrb[0].mxu0
      %787 = vmatprep.mubr.bf16.mxu0 %v605
      %788 = vmatmul.mubr.bf16.gmra.mrb[0].mxu0 %v393
      %v789 = vpop.f32.mrb[0].mxu0
      %v790 = vadd.f32 %v693, %v789
      %v791 = vpop.f32.mrb[0].mxu0
      %v792 = vpop.f32.mrb[0].mxu0
      %v793 = vadd.f32 %v696, %v792
      %v794 = vpop.f32.mrb[0].mxu0
      %795 = vmatprep.mubr.bf16.mxu0 %v608
      %796 = vmatmul.mubr.bf16.gmra.mrb[0].mxu0 %v397
      %v797 = vpop.f32.mrb[0].mxu0
      %v798 = vadd.f32 %v701, %v797
      %v799 = vpop.f32.mrb[0].mxu0
      %v800 = vpop.f32.mrb[0].mxu0
      %v801 = vadd.f32 %v704, %v800
      %v802 = vpop.f32.mrb[0].mxu0
      %803 = vdwg.mxu0
      %v804 = vmax.f32 %v742, 0.0
      %v805 = vmax.f32 %v745, 0.0
      %v806 = vmax.f32 %v750, 0.0
      %v807 = vmax.f32 %v753, 0.0
      %v808 = vmax.f32 %v758, 0.0
      %v809 = vmax.f32 %v761, 0.0
      %v810 = vmax.f32 %v766, 0.0
      %v811 = vmax.f32 %v769, 0.0
      %v812 = vmax.f32 %v774, 0.0
      %v813 = vmax.f32 %v777, 0.0
      %v814 = vmax.f32 %v782, 0.0
      %v815 = vmax.f32 %v785, 0.0
      %v816 = vmax.f32 %v790, 0.0
      %v817 = vmax.f32 %v793, 0.0
      %v818 = vmax.f32 %v798, 0.0
      %v819 = vmax.f32 %v801, 0.0
      %v820 = vpack.c.bf16 %v805, %v804
      %v821 = vpack.c.bf16 %v807, %v806
      %v822 = vpack.c.bf16 %v809, %v808
      %v823 = vpack.c.bf16 %v811, %v810
      %v824 = vpack.c.bf16 %v813, %v812
      %v825 = vpack.c.bf16 %v815, %v814
      %v826 = vpack.c.bf16 %v817, %v816
      %v827 = vpack.c.bf16 %v819, %v818
      %v836 = vunpack.c.l.b16 %v820
      %v837 = vunpack.c.h.b16 %v820
      %v838 = vunpack.c.l.b16 %v821
      %v839 = vunpack.c.h.b16 %v821
      %v840 = vunpack.c.l.b16 %v822
      %v841 = vunpack.c.h.b16 %v822
      %v842 = vunpack.c.l.b16 %v823
      %v843 = vunpack.c.h.b16 %v823
      %v844 = vunpack.c.l.b16 %v824
      %v845 = vunpack.c.h.b16 %v824
      %v846 = vunpack.c.l.b16 %v825
      %v847 = vunpack.c.h.b16 %v825
      %v848 = vunpack.c.l.b16 %v826
      %v849 = vunpack.c.h.b16 %v826
      %v850 = vunpack.c.l.b16 %v827
      %v851 = vunpack.c.h.b16 %v827
      %v852 = vpack.c.b16 %v836, %v836
      %v853 = vpack.c.b16 %v837, %v837
      %v854 = vpack.c.b16 %v838, %v838
      %v855 = vpack.c.b16 %v839, %v839
      %v856 = vpack.c.b16 %v840, %v840
      %v857 = vpack.c.b16 %v841, %v841
      %v858 = vpack.c.b16 %v842, %v842
      %v859 = vpack.c.b16 %v843, %v843
      %v860 = vpack.c.b16 %v844, %v844
      %v861 = vpack.c.b16 %v845, %v845
      %v862 = vpack.c.b16 %v846, %v846
      %v863 = vpack.c.b16 %v847, %v847
      %v864 = vpack.c.b16 %v848, %v848
      %v865 = vpack.c.b16 %v849, %v849
      %v866 = vpack.c.b16 %v850, %v850
      %v867 = vpack.c.b16 %v851, %v851
      %884 = vst [vmem:[%s175] sm:$0xf] %v852
      %885 = vst [vmem:[%s175 + $0x4] sm:$0xf] %v853
      %886 = vst [vmem:[%s175 + $0x8] sm:$0xf] %v854
      %887 = vst [vmem:[%s175 + $0xc] sm:$0xf] %v855
      %888 = vst [vmem:[%s175 + $0x10] sm:$0xf] %v856
      %889 = vst [vmem:[%s175 + $0x14] sm:$0xf] %v857
      %890 = vst [vmem:[%s175 + $0x18] sm:$0xf] %v858
      %891 = vst [vmem:[%s175 + $0x1c] sm:$0xf] %v859
      %892 = vst [vmem:[%s175 + $0x20] sm:$0xf] %v860
      %893 = vst [vmem:[%s175 + $0x24] sm:$0xf] %v861
      %894 = vst [vmem:[%s175 + $0x28] sm:$0xf] %v862
      %895 = vst [vmem:[%s175 + $0x2c] sm:$0xf] %v863
      %896 = vst [vmem:[%s175 + $0x30] sm:$0xf] %v864
      %897 = vst [vmem:[%s175 + $0x34] sm:$0xf] %v865
      %898 = vst [vmem:[%s175 + $0x38] sm:$0xf] %v866
      %899 = vst [vmem:[%s175 + $0x3c] sm:$0xf] %v867
      %s900 = smul.u32 16, %s14
      %p901 = scmp.lt.s32.totalorder %s900, 63
      %s902 = scalar_select %p901, %s900, 63
      %s903 = smul.addr %s902, 4
      %s904 = scalar_lea.vmem %s3, %s903
      // Predicated region
      $region33: #{inception4c_forward.4} parent=31 // pred_check
        %p905 = pneg %p100
      $region34: #{inception4c_forward.4} parent=31 // pred_check_branch
        %907 = sbr.rel (%p905) target = $region36
      $region35: #{inception4c_forward.4} parent=31 // pred_region
        %s908 = smul.u32 16, %s14
      $region36: #{inception4c_forward.4} parent=31 // pred_fallthru
        _
    $region32: #{inception4c_forward.4} parent=5 // pred_fallthru
      _
    %p909 = scmp.le.s32.totalorder 2, %s9
    // Predicated region
    $region37: #{inception4c_forward.4} parent=5 // pred_check
      %p910 = pneg %p909
    $region38: #{inception4c_forward.4} parent=5 // pred_check_branch
      %912 = sbr.rel (%p910) target = $region40
    $region39: #{inception4c_forward.4} parent=5 // pred_region
      %s913 = ssub.s32 %s9, 2
      // Predicated region
      $region41: #{inception4c_forward.4} parent=39 // pred_check
        %p914 = pneg %p106
      $region42: #{inception4c_forward.4} parent=39 // pred_check_branch
        %916 = sbr.rel (%p914) target = $region44
      $region43: #{inception4c_forward.4} parent=39 // pred_region
        %s917 = smul.u32 16, %s15
        %p918 = scmp.lt.s32.totalorder %s917, 63
        %s919 = scalar_select %p918, %s917, 63
        %s920 = smul.addr %s919, 4
        %s921 = scalar_lea.vmem %s3, %s920
      $region44: #{inception4c_forward.4} parent=39 // pred_fallthru
        _
    $region40: #{inception4c_forward.4} parent=5 // pred_fallthru
      _
  $region6: #{inception4c_forward.4} parent=0 // loop_footer
    %s13 = sadd.s32 1, %s9
  $region7: #{inception4c_forward.4} parent=0 // loop_footer_branch
    %8 = sbr.rel target = $region3
  $region8: #{inception4c_forward.4} parent=0 // loop_exit
    _

// kernel: inception4c_forward.5
$region0: #{inception4c_forward.5}
  #allocation0 [shape = 'u32[]', space=smem, size = 0x4, offset = 0x4, fixed_abs, tag = 'smem constant byte address 0x4 - core index']
  #allocation1 [shape = 'u32[144,128]{1,0:T(1,128)}', space=vmem, size = 0x12000, scoped, tag = 'internal scratch']
  %s0 = inlined_call_operand.vmem [shape: bf16[512,288], index: 0, kind: input, shape index: {}]
  %s1 = inlined_call_operand.vmem [shape: bf16[288,32], index: 1, kind: input, shape index: {}]
  %s2 = inlined_call_operand.vmem [shape: f32[1,32], index: 2, kind: input, shape index: {}]
  %s3 = inlined_call_operand.vmem [shape: bf16[512,96], index: 3, kind: input, shape index: {}]
  %s4 = inlined_call_operand.vmem [shape: bf16[512,128], index: 4, kind: input, shape index: {}]
  %s5 = inlined_call_operand.hbm [shape: f32[512,256], index: 5, kind: output, shape index: {}]
  %s6 = sld [smem:[#allocation0]]
  $region53: #{inception4c_forward.5} parent=0
    _
  %s8 = ssub.s32 1, %s6
  %s9 = scalar_select 0, %s8, %s6
  $region1: #{inception4c_forward.5} parent=0
    #allocation2 [shape = 'u8[262144]{0}', space=vmem, size = 0x40000, scoped, tag = 'output window, operand 0']
    #allocation3 [shape = 's32[2]{0}', space=sflag, size = 0x8, scoped, tag = 'scoped memory for inception4c_forward.5']
    %10 = vsyncpa [#allocation3], 0
    %s11 = scalar_lea.sflag [#allocation3], 1
    %12 = vsyncpa %s11, 0
    loop: start=0, step=1, limit=6
    $region2: #{inception4c_forward.5} parent=1 // loop_pre_header
      _
    $region3: #{inception4c_forward.5} parent=1 // loop_header
      %s14 = sphi 0, %s18
      %p15 = scmp.ge.s32.totalorder %s14, 6
      %s24 = sphi 0, %s26
      %s27 = sphi 0, %s24
      %s28 = sphi 0, %s27
      %s44 = sphi 0, %s28
      %s48 = sphi 0, %s48
      %s50 = sphi 0, %s48
      %s51 = sphi 0, %s50
      %s65 = sphi 0, %s51
      %s69 = sphi 0, %s69
      %s71 = sphi 0, %s69
      %s72 = sphi 0, %s71
      %s86 = sphi 0, %s72
      %s92 = sphi 0, %s94
      %s95 = sphi 0, %s92
      %s96 = sphi 0, %s95
      %s112 = sphi 0, %s96
      %s118 = sphi 0, %s120
      %s121 = sphi 0, %s118
      %s122 = sphi 0, %s121
      %s138 = sphi 0, %s122
      %s144 = sphi 0, %s146
      %s147 = sphi 0, %s144
      %s148 = sphi 0, %s147
      %s164 = sphi 0, %s148
    $region4: #{inception4c_forward.5} parent=1 // loop_header_branch
      %17 = sbr.rel (%p15) target = $region8
    $region5: #{inception4c_forward.5} parent=1 // loop_body
      %s19 = ssub.s32 %s14, 1
      %s20 = ssub.s32 %s14, 2
      %s21 = sadd.s32 %s14, 1
      %s22 = ssub.s32 %s14, %s21
      %p23 = scmp.eq.s32.totalorder %s22, 0
      %s25 = sadd.s32 %s24, 1
      %s26 = scalar_select %p23, %s24, %s25
      %p29 = pneg %p23
      %p30 = scmp.eq.s32.totalorder %s14, 3
      %p31 = por %p29, %p30
      %p32 = scmp.ne.s32.totalorder %s24, %s27
      %p33 = scmp.eq.s32.totalorder %s14, 0
      %p34 = por %p32, %p33
      %p35 = scmp.ne.s32.totalorder %s24, %s27
      %p36 = scmp.eq.s32.totalorder %s19, 3
      %p37 = por %p35, %p36
      %p38 = scmp.ne.s32.totalorder %s27, %s28
      %p39 = scmp.eq.s32.totalorder %s19, 0
      %p40 = por %p38, %p39
      %p41 = scmp.ne.s32.totalorder %s27, %s28
      %p42 = scmp.eq.s32.totalorder %s20, 3
      %p43 = por %p41, %p42
      %p45 = scmp.ne.s32.totalorder %s28, %s44
      %p46 = scmp.eq.s32.totalorder %s20, 0
      %p47 = por %p45, %p46
      %s49 = sadd.s32 %s48, 1
      %p52 = scmp.eq.s32.totalorder %s14, 3
      %p53 = scmp.ne.s32.totalorder %s48, %s50
      %p54 = scmp.eq.s32.totalorder %s14, 0
      %p55 = por %p53, %p54
      %p56 = scmp.ne.s32.totalorder %s48, %s50
      %p57 = scmp.eq.s32.totalorder %s19, 3
      %p58 = por %p56, %p57
      %p59 = scmp.ne.s32.totalorder %s50, %s51
      %p60 = scmp.eq.s32.totalorder %s19, 0
      %p61 = por %p59, %p60
      %p62 = scmp.ne.s32.totalorder %s50, %s51
      %p63 = scmp.eq.s32.totalorder %s20, 3
      %p64 = por %p62, %p63
      %p66 = scmp.ne.s32.totalorder %s51, %s65
      %p67 = scmp.eq.s32.totalorder %s20, 0
      %p68 = por %p66, %p67
      %s70 = sadd.s32 %s69, 1
      %p73 = scmp.eq.s32.totalorder %s14, 3
      %p74 = scmp.ne.s32.totalorder %s69, %s71
      %p75 = scmp.eq.s32.totalorder %s14, 0
      %p76 = por %p74, %p75
      %p77 = scmp.ne.s32.totalorder %s69, %s71
      %p78 = scmp.eq.s32.totalorder %s19, 3
      %p79 = por %p77, %p78
      %p80 = scmp.ne.s32.totalorder %s71, %s72
      %p81 = scmp.eq.s32.totalorder %s19, 0
      %p82 = por %p80, %p81
      %p83 = scmp.ne.s32.totalorder %s71, %s72
      %p84 = scmp.eq.s32.totalorder %s20, 3
      %p85 = por %p83, %p84
      %p87 = scmp.ne.s32.totalorder %s72, %s86
      %p88 = scmp.eq.s32.totalorder %s20, 0
      %p89 = por %p87, %p88
      %s90 = ssub.s32 %s14, %s21
      %p91 = scmp.eq.s32.totalorder %s90, 0
      %s93 = sadd.s32 %s92, 1
      %s94 = scalar_select %p91, %s92, %s93
      %p97 = pneg %p91
      %p98 = scmp.eq.s32.totalorder %s14, 3
      %p99 = por %p97, %p98
      %p100 = scmp.ne.s32.totalorder %s92, %s95
      %p101 = scmp.eq.s32.totalorder %s14, 0
      %p102 = por %p100, %p101
      %p103 = scmp.ne.s32.totalorder %s92, %s95
      %p104 = scmp.eq.s32.totalorder %s19, 3
      %p105 = por %p103, %p104
      %p106 = scmp.ne.s32.totalorder %s95, %s96
      %p107 = scmp.eq.s32.totalorder %s19, 0
      %p108 = por %p106, %p107
      %p109 = scmp.ne.s32.totalorder %s95, %s96
      %p110 = scmp.eq.s32.totalorder %s20, 3
      %p111 = por %p109, %p110
      %p113 = scmp.ne.s32.totalorder %s96, %s112
      %p114 = scmp.eq.s32.totalorder %s20, 0
      %p115 = por %p113, %p114
      %s116 = ssub.s32 %s14, %s21
      %p117 = scmp.eq.s32.totalorder %s116, 0
      %s119 = sadd.s32 %s118, 1
      %s120 = scalar_select %p117, %s118, %s119
      %p123 = pneg %p117
      %p124 = scmp.eq.s32.totalorder %s14, 3
      %p125 = por %p123, %p124
      %p126 = scmp.ne.s32.totalorder %s118, %s121
      %p127 = scmp.eq.s32.totalorder %s14, 0
      %p128 = por %p126, %p127
      %p129 = scmp.ne.s32.totalorder %s118, %s121
      %p130 = scmp.eq.s32.totalorder %s19, 3
      %p131 = por %p129, %p130
      %p132 = scmp.ne.s32.totalorder %s121, %s122
      %p133 = scmp.eq.s32.totalorder %s19, 0
      %p134 = por %p132, %p133
      %p135 = scmp.ne.s32.totalorder %s121, %s122
      %p136 = scmp.eq.s32.totalorder %s20, 3
      %p137 = por %p135, %p136
      %p139 = scmp.ne.s32.totalorder %s122, %s138
      %p140 = scmp.eq.s32.totalorder %s20, 0
      %p141 = por %p139, %p140
      %s142 = ssub.s32 %s14, %s21
      %p143 = scmp.eq.s32.totalorder %s142, 0
      %s145 = sadd.s32 %s144, 1
      %s146 = scalar_select %p143, %s144, %s145
      %p149 = pneg %p143
      %p150 = scmp.eq.s32.totalorder %s14, 3
      %p151 = por %p149, %p150
      %p152 = scmp.ne.s32.totalorder %s144, %s147
      %p153 = scmp.eq.s32.totalorder %s14, 0
      %p154 = por %p152, %p153
      %p155 = scmp.ne.s32.totalorder %s144, %s147
      %p156 = scmp.eq.s32.totalorder %s19, 3
      %p157 = por %p155, %p156
      %p158 = scmp.ne.s32.totalorder %s147, %s148
      %p159 = scmp.eq.s32.totalorder %s19, 0
      %p160 = por %p158, %p159
      %p161 = scmp.ne.s32.totalorder %s147, %s148
      %p162 = scmp.eq.s32.totalorder %s20, 3
      %p163 = por %p161, %p162
      %p165 = scmp.ne.s32.totalorder %s148, %s164
      %p166 = scmp.eq.s32.totalorder %s20, 0
      %p167 = por %p165, %p166
      %p168 = scmp.le.s32.totalorder 1, %s14
      %p169 = scmp.lt.s32.totalorder %s14, 5
      %p170 = pnand %p168, %p169
      %p171 = pneg %p170
      // Predicated region
      $region9: #{inception4c_forward.5} parent=5 // pred_check
        _
      $region10: #{inception4c_forward.5} parent=5 // pred_check_branch
        %173 = sbr.rel (%p170) target = $region12
      $region11: #{inception4c_forward.5} parent=5 // pred_region
        %s174 = ssub.s32 %s14, 1
        // Predicated region
        $region13: #{inception4c_forward.5} parent=11 // pred_check
          %p175 = pneg %p61
        $region14: #{inception4c_forward.5} parent=11 // pred_check_branch
          %177 = sbr.rel (%p175) target = $region16
        $region15: #{inception4c_forward.5} parent=11 // pred_region
          _
        $region16: #{inception4c_forward.5} parent=11 // pred_fallthru
          _
        // Predicated region
        $region17: #{inception4c_forward.5} parent=11 // pred_check
          %p178 = pneg %p82
        $region18: #{inception4c_forward.5} parent=11 // pred_check_branch
          %180 = sbr.rel (%p178) target = $region20
        $region19: #{inception4c_forward.5} parent=11 // pred_region
          _
        $region20: #{inception4c_forward.5} parent=11 // pred_fallthru
          _
      $region12: #{inception4c_forward.5} parent=5 // pred_fallthru
        _
      %p181 = scmp.lt.s32.totalorder %s14, 4
      // Predicated region
      $region21: #{inception4c_forward.5} parent=5 // pred_check
        %p182 = pneg %p181
      $region22: #{inception4c_forward.5} parent=5 // pred_check_branch
        %184 = sbr.rel (%p182) target = $region24
      $region23: #{inception4c_forward.5} parent=5 // pred_region
        // Predicated region
        $region25: #{inception4c_forward.5} parent=23 // pred_check
          %p185 = pneg %p34
        $region26: #{inception4c_forward.5} parent=23 // pred_check_branch
          %187 = sbr.rel (%p185) target = $region28
        $region27: #{inception4c_forward.5} parent=23 // pred_region
          %s188 = smul.u32 16, %s14
          %p189 = scmp.lt.s32.totalorder %s188, 63
          %s190 = scalar_select %p189, %s188, 63
          %s191 = smul.addr %s190, 3
          %s192 = smul.addr %s191, 4
          %s193 = scalar_lea.vmem %s0, %s192
          %s194 = smul.u32 16, %s14
        $region28: #{inception4c_forward.5} parent=23 // pred_fallthru
          _
        // Predicated region
        $region29: #{inception4c_forward.5} parent=23 // pred_check
          %p195 = pneg %p102
        $region30: #{inception4c_forward.5} parent=23 // pred_check_branch
          %197 = sbr.rel (%p195) target = $region32
        $region31: #{inception4c_forward.5} parent=23 // pred_region
          %s198 = smul.u32 16, %s14
          %p199 = scmp.lt.s32.totalorder %s198, 63
          %s200 = scalar_select %p199, %s198, 63
          %s201 = smul.addr %s200, 4
          %s202 = scalar_lea.vmem %s3, %s201
          %s203 = smul.u32 16, %s14
        $region32: #{inception4c_forward.5} parent=23 // pred_fallthru
          _
        // Predicated region
        $region33: #{inception4c_forward.5} parent=23 // pred_check
          %p204 = pneg %p128
        $region34: #{inception4c_forward.5} parent=23 // pred_check_branch
          %206 = sbr.rel (%p204) target = $region36
        $region35: #{inception4c_forward.5} parent=23 // pred_region
          %s207 = smul.u32 16, %s14
          %p208 = scmp.lt.s32.totalorder %s207, 63
          %s209 = scalar_select %p208, %s207, 63
          %s210 = smul.addr %s209, 4
          %s211 = scalar_lea.vmem %s4, %s210
          %s212 = smul.u32 16, %s14
        $region36: #{inception4c_forward.5} parent=23 // pred_fallthru
          _
      $region24: #{inception4c_forward.5} parent=5 // pred_fallthru
        _
      %p213 = scmp.le.s32.totalorder 1, %s14
      %p214 = scmp.lt.s32.totalorder %s14, 5
      %p215 = pnand %p213, %p214
      %p216 = pneg %p215
      // Predicated region
      $region37: #{inception4c_forward.5} parent=5 // pred_check
        _
      $region38: #{inception4c_forward.5} parent=5 // pred_check_branch
        %218 = sbr.rel (%p215) target = $region40
      $region39: #{inception4c_forward.5} parent=5 // pred_region
        %s219 = ssub.s32 %s14, 1
        %s220 = smul.u32 16, %s19
        %p221 = scmp.lt.s32.totalorder %s220, 63
        %s222 = scalar_select %p221, %s220, 63
        %s223 = smul.addr %s222, 3
        %s224 = smul.addr %s223, 4
        %s225 = scalar_lea.vmem %s0, %s224
        %p226 = pneg %p40
        %p227 = pneg %p37
        %p228 = pneg %p61
        %p229 = pneg %p58
        %p230 = pneg %p82
        %p231 = pneg %p79
        %s232 = smul.u32 16, %s19
        %p233 = scmp.lt.s32.totalorder %s232, 63
        %s234 = scalar_select %p233, %s232, 63
        %s235 = smul.addr %s234, 4
        %s236 = scalar_lea.vmem %s3, %s235
        %p237 = pneg %p108
        %p238 = pneg %p105
        %s239 = smul.u32 16, %s19
        %p240 = scmp.lt.s32.totalorder %s239, 63
        %s241 = scalar_select %p240, %s239, 63
        %s242 = smul.addr %s241, 4
        %s243 = scalar_lea.vmem %s4, %s242
        %p244 = pneg %p134
        %p245 = pneg %p131
        %p246 = pneg %p160
        %p247 = pneg %p157
        %s248 = sand.u32 %s147, 1
        %s249 = scalar_lea.sflag [#allocation3], %s248
        %s250 = sand.u32 %s147, 1
        %s251 = smul.addr %s250, 256
        %s252 = scalar_lea.vmem [#allocation2], %s251
        %s253 = smul.u32 16, %s19
        %p254 = scmp.lt.s32.totalorder %s253, 63
        %s255 = scalar_select %p254, %s253, 63
        %s256 = smul.addr %s255, 3
        %s257 = smul.addr %s256, 4
        %s258 = scalar_lea.vmem %s0, %s257
        %s259 = smul.u32 16, %s19
        %s260 = smul.u32 16, %s19
        %p261 = scmp.lt.s32.totalorder %s260, 63
        %s262 = scalar_select %p261, %s260, 63
        %s263 = smul.addr %s262, 4
        %s264 = scalar_lea.vmem %s3, %s263
        %s265 = smul.u32 16, %s19
        %s266 = smul.u32 16, %s19
        %p267 = scmp.lt.s32.totalorder %s266, 63
        %s268 = scalar_select %p267, %s266, 63
        %s269 = smul.addr %s268, 4
        %s270 = scalar_lea.vmem %s4, %s269
        %s271 = smul.u32 16, %s19
        %s272 = smul.u32 16, %s19
        %v274 = vld [vmem:[%s258] sm:$0xff]
        %v275 = vld [vmem:[%s258 + $0x8] sm:$0xf]
        %v276 = vld [vmem:[%s258 + $0xc] sm:$0xff]
        %v277 = vld [vmem:[%s258 + $0x14] sm:$0xf]
        %v278 = vld [vmem:[%s258 + $0x18] sm:$0xff]
        %v279 = vld [vmem:[%s258 + $0x20] sm:$0xf]
        %v280 = vld [vmem:[%s258 + $0x24] sm:$0xff]
        %v281 = vld [vmem:[%s258 + $0x2c] sm:$0xf]
        %v282 = vld [vmem:[%s258 + $0x30] sm:$0xff]
        %v283 = vld [vmem:[%s258 + $0x38] sm:$0xf]
        %v284 = vld [vmem:[%s258 + $0x3c] sm:$0xff]
        %v285 = vld [vmem:[%s258 + $0x44] sm:$0xf]
        %v286 = vld [vmem:[%s258 + $0x48] sm:$0xff]
        %v287 = vld [vmem:[%s258 + $0x50] sm:$0xf]
        %v288 = vld [vmem:[%s258 + $0x54] sm:$0xff]
        %v289 = vld [vmem:[%s258 + $0x5c] sm:$0xf]
        %v290 = vld [vmem:[%s258 + $0x60] sm:$0xff]
        %v291 = vld [vmem:[%s258 + $0x68] sm:$0xf]
        %v292 = vld [vmem:[%s258 + $0x6c] sm:$0xff]
        %v293 = vld [vmem:[%s258 + $0x74] sm:$0xf]
        %v294 = vld [vmem:[%s258 + $0x78] sm:$0xff]
        %v295 = vld [vmem:[%s258 + $0x80] sm:$0xf]
        %v296 = vld [vmem:[%s258 + $0x84] sm:$0xff]
        %v297 = vld [vmem:[%s258 + $0x8c] sm:$0xf]
        %v298 = vld [vmem:[%s258 + $0x90] sm:$0xff]
        %v299 = vld [vmem:[%s258 + $0x98] sm:$0xf]
        %v300 = vld [vmem:[%s258 + $0x9c] sm:$0xff]
        %v301 = vld [vmem:[%s258 + $0xa4] sm:$0xf]
        %v302 = vld [vmem:[%s258 + $0xa8] sm:$0xff]
        %v303 = vld [vmem:[%s258 + $0xb0] sm:$0xf]
        %v304 = vld [vmem:[%s258 + $0xb4] sm:$0xff]
        %v305 = vld [vmem:[%s258 + $0xbc] sm:$0xf]
        %v306 = vld [vmem:[%s1] sm:$0xf]
        %v307 = vld [vmem:[%s1 + $0x4] sm:$0xf]
        %v308 = vld [vmem:[%s1 + $0x8] sm:$0xf]
        %v309 = vld [vmem:[%s1 + $0xc] sm:$0xf]
        %v310 = vld [vmem:[%s1 + $0x10] sm:$0xf]
        %v311 = vld [vmem:[%s1 + $0x14] sm:$0xf]
        %v312 = vld [vmem:[%s1 + $0x18] sm:$0xf]
        %v313 = vld [vmem:[%s1 + $0x1c] sm:$0xf]
        %v314 = vld [vmem:[%s1 + $0x20] sm:$0xf]
        %v315 = vld [vmem:[%s1 + $0x24] sm:$0xf]
        %v316 = vld [vmem:[%s1 + $0x28] sm:$0xf]
        %v317 = vld [vmem:[%s1 + $0x2c] sm:$0xf]
        %v318 = vld [vmem:[%s1 + $0x30] sm:$0xf]
        %v319 = vld [vmem:[%s1 + $0x34] sm:$0xf]
        %v320 = vld [vmem:[%s1 + $0x38] sm:$0xf]
        %v321 = vld [vmem:[%s1 + $0x3c] sm:$0xf]
        %v322 = vld [vmem:[%s1 + $0x40] sm:$0xf]
        %v323 = vld [vmem:[%s1 + $0x44] sm:$0xf]
        %v324 = vld [vmem:[%s1 + $0x48] sm:$0xf]
        %v325 = vld [vmem:[%s1 + $0x4c] sm:$0xf]
        %v326 = vld [vmem:[%s1 + $0x50] sm:$0xf]
        %v327 = vld [vmem:[%s1 + $0x54] sm:$0xf]
        %v328 = vld [vmem:[%s1 + $0x58] sm:$0xf]
        %v329 = vld [vmem:[%s1 + $0x5c] sm:$0xf]
        %v330 = vld [vmem:[%s1 + $0x60] sm:$0xf]
        %v331 = vld [vmem:[%s1 + $0x64] sm:$0xf]
        %v332 = vld [vmem:[%s1 + $0x68] sm:$0xf]
        %v333 = vld [vmem:[%s1 + $0x6c] sm:$0xf]
        %v334 = vld [vmem:[%s1 + $0x70] sm:$0xf]
        %v335 = vld [vmem:[%s1 + $0x74] sm:$0xf]
        %v336 = vld [vmem:[%s1 + $0x78] sm:$0xf]
        %v337 = vld [vmem:[%s1 + $0x7c] sm:$0xf]
        %v338 = vld [vmem:[%s1 + $0x80] sm:$0xf]
        %v339 = vld [vmem:[%s1 + $0x84] sm:$0xf]
        %v340 = vld [vmem:[%s1 + $0x88] sm:$0xf]
        %v341 = vld [vmem:[%s1 + $0x8c] sm:$0xf]
        %v342 = vld [vmem:[%s2] sm:$0x1]
        %v344 = vlaneseq
        %v345 = vshrl.u32 %v344, 7
        %v346 = vsub.s32 0, %v345
        %v347 = vrot.slane %v342, %v346
        %v381 = vunpack.c.l.b16 %v274
        %v382 = vunpack.c.h.b16 %v274
        %v383 = vunpack.c.l.b16 %v275
        %v384 = vunpack.c.l.b16 %v276
        %v385 = vunpack.c.h.b16 %v276
        %v386 = vunpack.c.l.b16 %v277
        %v387 = vunpack.c.l.b16 %v278
        %v388 = vunpack.c.h.b16 %v278
        %v389 = vunpack.c.l.b16 %v279
        %v390 = vunpack.c.l.b16 %v280
        %v391 = vunpack.c.h.b16 %v280
        %v392 = vunpack.c.l.b16 %v281
        %v393 = vunpack.c.l.b16 %v282
        %v394 = vunpack.c.h.b16 %v282
        %v395 = vunpack.c.l.b16 %v283
        %v396 = vunpack.c.l.b16 %v284
        %v397 = vunpack.c.h.b16 %v284
        %v398 = vunpack.c.l.b16 %v285
        %v399 = vunpack.c.l.b16 %v286
        %v400 = vunpack.c.h.b16 %v286
        %v401 = vunpack.c.l.b16 %v287
        %v402 = vunpack.c.l.b16 %v288
        %v403 = vunpack.c.h.b16 %v288
        %v404 = vunpack.c.l.b16 %v289
        %v405 = vunpack.c.l.b16 %v290
        %v406 = vunpack.c.h.b16 %v290
        %v407 = vunpack.c.l.b16 %v291
        %v408 = vunpack.c.l.b16 %v292
        %v409 = vunpack.c.h.b16 %v292
        %v410 = vunpack.c.l.b16 %v293
        %v411 = vunpack.c.l.b16 %v294
        %v412 = vunpack.c.h.b16 %v294
        %v413 = vunpack.c.l.b16 %v295
        %v414 = vunpack.c.l.b16 %v296
        %v415 = vunpack.c.h.b16 %v296
        %v416 = vunpack.c.l.b16 %v297
        %v417 = vunpack.c.l.b16 %v298
        %v418 = vunpack.c.h.b16 %v298
        %v419 = vunpack.c.l.b16 %v299
        %v420 = vunpack.c.l.b16 %v300
        %v421 = vunpack.c.h.b16 %v300
        %v422 = vunpack.c.l.b16 %v301
        %v423 = vunpack.c.l.b16 %v302
        %v424 = vunpack.c.h.b16 %v302
        %v425 = vunpack.c.l.b16 %v303
        %v426 = vunpack.c.l.b16 %v304
        %v427 = vunpack.c.h.b16 %v304
        %v428 = vunpack.c.l.b16 %v305
        %v429 = vpack.c.b16 %v384, %v381
        %v430 = vpack.c.b16 %v385, %v382
        %v431 = vpack.c.b16 %v386, %v383
        %v432 = vpack.c.b16 %v390, %v387
        %v433 = vpack.c.b16 %v391, %v388
        %v434 = vpack.c.b16 %v392, %v389
        %v435 = vpack.c.b16 %v396, %v393
        %v436 = vpack.c.b16 %v397, %v394
        %v437 = vpack.c.b16 %v398, %v395
        %v438 = vpack.c.b16 %v402, %v399
        %v439 = vpack.c.b16 %v403, %v400
        %v440 = vpack.c.b16 %v404, %v401
        %v441 = vpack.c.b16 %v408, %v405
        %v442 = vpack.c.b16 %v409, %v406
        %v443 = vpack.c.b16 %v410, %v407
        %v444 = vpack.c.b16 %v414, %v411
        %v445 = vpack.c.b16 %v415, %v412
        %v446 = vpack.c.b16 %v416, %v413
        %v447 = vpack.c.b16 %v420, %v417
        %v448 = vpack.c.b16 %v421, %v418
        %v449 = vpack.c.b16 %v422, %v419
        %v450 = vpack.c.b16 %v426, %v423
        %v451 = vpack.c.b16 %v427, %v424
        %v452 = vpack.c.b16 %v428, %v425
        %v505 = vunpack.c.l.b16 %v306
        %v506 = vunpack.c.l.b16 %v307
        %v507 = vunpack.c.l.b16 %v308
        %v508 = vunpack.c.l.b16 %v309
        %v509 = vunpack.c.l.b16 %v310
        %v510 = vunpack.c.l.b16 %v311
        %v511 = vunpack.c.l.b16 %v312
        %v512 = vunpack.c.l.b16 %v313
        %v513 = vunpack.c.l.b16 %v314
        %v514 = vunpack.c.l.b16 %v315
        %v515 = vunpack.c.l.b16 %v316
        %v516 = vunpack.c.l.b16 %v317
        %v517 = vunpack.c.l.b16 %v318
        %v518 = vunpack.c.l.b16 %v319
        %v519 = vunpack.c.l.b16 %v320
        %v520 = vunpack.c.l.b16 %v321
        %v521 = vunpack.c.l.b16 %v322
        %v522 = vunpack.c.l.b16 %v323
        %v523 = vunpack.c.l.b16 %v324
        %v524 = vunpack.c.l.b16 %v325
        %v525 = vunpack.c.l.b16 %v326
        %v526 = vunpack.c.l.b16 %v327
        %v527 = vunpack.c.l.b16 %v328
        %v528 = vunpack.c.l.b16 %v329
        %v529 = vunpack.c.l.b16 %v330
        %v530 = vunpack.c.l.b16 %v331
        %v531 = vunpack.c.l.b16 %v332
        %v532 = vunpack.c.l.b16 %v333
        %v533 = vunpack.c.l.b16 %v334
        %v534 = vunpack.c.l.b16 %v335
        %v535 = vunpack.c.l.b16 %v336
        %v536 = vunpack.c.l.b16 %v337
        %v537 = vunpack.c.l.b16 %v338
        %v538 = vunpack.c.l.b16 %v339
        %v539 = vunpack.c.l.b16 %v340
        %v540 = vunpack.c.l.b16 %v341
        %v541 = vpack.c.b16 %v506, %v505
        %v542 = vpack.c.b16 %v508, %v507
        %v543 = vpack.c.b16 %v510, %v509
        %v544 = vpack.c.b16 %v512, %v511
        %v545 = vpack.c.b16 %v514, %v513
        %v546 = vpack.c.b16 %v516, %v515
        %v547 = vpack.c.b16 %v518, %v517
        %v548 = vpack.c.b16 %v520, %v519
        %v549 = vpack.c.b16 %v522, %v521
        %v550 = vpack.c.b16 %v524, %v523
        %v551 = vpack.c.b16 %v526, %v525
        %v552 = vpack.c.b16 %v528, %v527
        %v553 = vpack.c.b16 %v530, %v529
        %v554 = vpack.c.b16 %v532, %v531
        %v555 = vpack.c.b16 %v534, %v533
        %v556 = vpack.c.b16 %v536, %v535
        %v557 = vpack.c.b16 %v538, %v537
        %v558 = vpack.c.b16 %v540, %v539
        %vm577 = vcmask 261120
        %v579 = vsel %vm577, %v431, 0
        %v582 = vsel %vm577, %v434, 0
        %v585 = vsel %vm577, %v437, 0
        %v588 = vsel %vm577, %v440, 0
        %v591 = vsel %vm577, %v443, 0
        %v594 = vsel %vm577, %v446, 0
        %v597 = vsel %vm577, %v449, 0
        %v600 = vsel %vm577, %v452, 0
        %602 = vmatprep.subr.bf16.mxu0 0
        %603 = vmatpush1.bf16.msra.mxu0 %v541
        %604 = vmatprep.subr.bf16.mxu0 0
        %605 = vmatpush1.bf16.msra.mxu0 %v542
        %606 = vmatprep.subr.bf16.mxu0 0
        %607 = vmatpush1.bf16.msra.mxu0 %v543
        %608 = vmatprep.subr.bf16.mxu0 0
        %609 = vmatpush1.bf16.msra.mxu0 %v544
        %610 = vmatprep.subr.bf16.mxu0 0
        %611 = vmatpush1.bf16.msra.mxu0 %v545
        %612 = vmatprep.subr.bf16.mxu0 0
        %613 = vmatpush1.bf16.msra.mxu0 %v546
        %614 = vmatprep.subr.bf16.mxu0 0
        %615 = vmatpush1.bf16.msra.mxu0 %v547
        %616 = vmatprep.subr.bf16.mxu0 0
        %617 = vmatpush1.bf16.msra.mxu0 %v548
        %618 = vmatprep.subr.bf16.mxu0 0
        %619 = vmatpush1.bf16.msra.mxu0 %v549
        %620 = vmatprep.subr.bf16.mxu0 0
        %621 = vmatpush1.bf16.msra.mxu0 %v550
        %622 = vmatprep.subr.bf16.mxu0 0
        %623 = vmatpush1.bf16.msra.mxu0 %v551
        %624 = vmatprep.subr.bf16.mxu0 0
        %625 = vmatpush1.bf16.msra.mxu0 %v552
        %626 = vmatprep.subr.bf16.mxu0 0
        %627 = vmatpush1.bf16.msra.mxu0 %v553
        %628 = vmatprep.subr.bf16.mxu0 0
        %629 = vmatpush1.bf16.msra.mxu0 %v554
        %630 = vmatprep.subr.bf16.mxu0 0
        %631 = vmatpush1.bf16.msra.mxu0 %v555
        %632 = vmatprep.subr.bf16.mxu0 0
        %633 = vmatpush1.bf16.msra.mxu0 %v556
        %634 = vmatprep.mubr.bf16.mxu0 %v430
        %635 = vmatmul.mubr.bf16.gmra.mrb[0].mxu0 %v429
        %v636 = vpop.f32.mrb[0].mxu0
        %v637 = vadd.f32 %v347, %v636
        %v638 = vpop.f32.mrb[0].mxu0
        %v639 = vpop.f32.mrb[0].mxu0
        %v640 = vadd.f32 %v347, %v639
        %v641 = vpop.f32.mrb[0].mxu0
        %642 = vmatprep.mubr.bf16.mxu0 %v433
        %643 = vmatmul.mubr.bf16.gmra.mrb[0].mxu0 %v432
        %v644 = vpop.f32.mrb[0].mxu0
        %v645 = vadd.f32 %v347, %v644
        %v646 = vpop.f32.mrb[0].mxu0
        %v647 = vpop.f32.mrb[0].mxu0
        %v648 = vadd.f32 %v347, %v647
        %v649 = vpop.f32.mrb[0].mxu0
        %650 = vmatprep.mubr.bf16.mxu0 %v436
        %651 = vmatmul.mubr.bf16.gmra.mrb[0].mxu0 %v435
        %v652 = vpop.f32.mrb[0].mxu0
        %v653 = vadd.f32 %v347, %v652
        %v654 = vpop.f32.mrb[0].mxu0
        %v655 = vpop.f32.mrb[0].mxu0
        %v656 = vadd.f32 %v347, %v655
        %v657 = vpop.f32.mrb[0].mxu0
        %658 = vmatprep.mubr.bf16.mxu0 %v439
        %659 = vmatmul.mubr.bf16.gmra.mrb[0].mxu0 %v438
        %v660 = vpop.f32.mrb[0].mxu0
        %v661 = vadd.f32 %v347, %v660
        %v662 = vpop.f32.mrb[0].mxu0
        %v663 = vpop.f32.mrb[0].mxu0
        %v664 = vadd.f32 %v347, %v663
        %v665 = vpop.f32.mrb[0].mxu0
        %666 = vmatprep.mubr.bf16.mxu0 %v442
        %667 = vmatmul.mubr.bf16.gmra.mrb[0].mxu0 %v441
        %v668 = vpop.f32.mrb[0].mxu0
        %v669 = vadd.f32 %v347, %v668
        %v670 = vpop.f32.mrb[0].mxu0
        %v671 = vpop.f32.mrb[0].mxu0
        %v672 = vadd.f32 %v347, %v671
        %v673 = vpop.f32.mrb[0].mxu0
        %674 = vmatprep.mubr.bf16.mxu0 %v445
        %675 = vmatmul.mubr.bf16.gmra.mrb[0].mxu0 %v444
        %v676 = vpop.f32.mrb[0].mxu0
        %v677 = vadd.f32 %v347, %v676
        %v678 = vpop.f32.mrb[0].mxu0
        %v679 = vpop.f32.mrb[0].mxu0
        %v680 = vadd.f32 %v347, %v679
        %v681 = vpop.f32.mrb[0].mxu0
        %682 = vmatprep.mubr.bf16.mxu0 %v448
        %683 = vmatmul.mubr.bf16.gmra.mrb[0].mxu0 %v447
        %v684 = vpop.f32.mrb[0].mxu0
        %v685 = vadd.f32 %v347, %v684
        %v686 = vpop.f32.mrb[0].mxu0
        %v687 = vpop.f32.mrb[0].mxu0
        %v688 = vadd.f32 %v347, %v687
        %v689 = vpop.f32.mrb[0].mxu0
        %690 = vmatprep.mubr.bf16.mxu0 %v451
        %691 = vmatmul.mubr.bf16.gmra.mrb[0].mxu0 %v450
        %v692 = vpop.f32.mrb[0].mxu0
        %v693 = vadd.f32 %v347, %v692
        %v694 = vpop.f32.mrb[0].mxu0
        %v695 = vpop.f32.mrb[0].mxu0
        %v696 = vadd.f32 %v347, %v695
        %v697 = vpop.f32.mrb[0].mxu0
        %698 = vdwg.mxu0
        %699 = vmatprep.subr.bf16.mxu0 0
        %700 = vmatpush1.bf16.msra.mxu0 %v557
        %701 = vmatprep.subr.bf16.mxu0 0
        %702 = vmatpush1.bf16.msra.mxu0 %v558
        %703 = vmatprep.subr.bf16.mxu0 0
        %704 = vmatpush1.bf16.msra.mxu0 0
        %705 = vmatprep.subr.bf16.mxu0 0
        %706 = vmatpush1.bf16.msra.mxu0 0
        %707 = vmatprep.subr.bf16.mxu0 0
        %708 = vmatpush1.bf16.msra.mxu0 0
        %709 = vmatprep.subr.bf16.mxu0 0
        %710 = vmatpush1.bf16.msra.mxu0 0
        %711 = vmatprep.subr.bf16.mxu0 0
        %712 = vmatpush1.bf16.msra.mxu0 0
        %713 = vmatprep.subr.bf16.mxu0 0
        %714 = vmatpush1.bf16.msra.mxu0 0
        %715 = vmatprep.subr.bf16.mxu0 0
        %716 = vmatpush1.bf16.msra.mxu0 0
        %717 = vmatprep.subr.bf16.mxu0 0
        %718 = vmatpush1.bf16.msra.mxu0 0
        %719 = vmatprep.subr.bf16.mxu0 0
        %720 = vmatpush1.bf16.msra.mxu0 0
        %721 = vmatprep.subr.bf16.mxu0 0
        %722 = vmatpush1.bf16.msra.mxu0 0
        %723 = vmatprep.subr.bf16.mxu0 0
        %724 = vmatpush1.bf16.msra.mxu0 0
        %725 = vmatprep.subr.bf16.mxu0 0
        %726 = vmatpush1.bf16.msra.mxu0 0
        %727 = vmatprep.subr.bf16.mxu0 0
        %728 = vmatpush1.bf16.msra.mxu0 0
        %729 = vmatprep.subr.bf16.mxu0 0
        %730 = vmatpush1.bf16.msra.mxu0 0
        %731 = vmatprep.mubr.bf16.mxu0 0
        %732 = vmatmul.mubr.bf16.gmra.mrb[0].mxu0 %v579
        %v733 = vpop.f32.mrb[0].mxu0
        %v734 = vadd.f32 %v637, %v733
        %v735 = vpop.f32.mrb[0].mxu0
        %v736 = vpop.f32.mrb[0].mxu0
        %v737 = vadd.f32 %v640, %v736
        %v738 = vpop.f32.mrb[0].mxu0
        %739 = vmatprep.mubr.bf16.mxu0 0
        %740 = vmatmul.mubr.bf16.gmra.mrb[0].mxu0 %v582
        %v741 = vpop.f32.mrb[0].mxu0
        %v742 = vadd.f32 %v645, %v741
        %v743 = vpop.f32.mrb[0].mxu0
        %v744 = vpop.f32.mrb[0].mxu0
        %v745 = vadd.f32 %v648, %v744
        %v746 = vpop.f32.mrb[0].mxu0
        %747 = vmatprep.mubr.bf16.mxu0 0
        %748 = vmatmul.mubr.bf16.gmra.mrb[0].mxu0 %v585
        %v749 = vpop.f32.mrb[0].mxu0
        %v750 = vadd.f32 %v653, %v749
        %v751 = vpop.f32.mrb[0].mxu0
        %v752 = vpop.f32.mrb[0].mxu0
        %v753 = vadd.f32 %v656, %v752
        %v754 = vpop.f32.mrb[0].mxu0
        %755 = vmatprep.mubr.bf16.mxu0 0
        %756 = vmatmul.mubr.bf16.gmra.mrb[0].mxu0 %v588
        %v757 = vpop.f32.mrb[0].mxu0
        %v758 = vadd.f32 %v661, %v757
        %v759 = vpop.f32.mrb[0].mxu0
        %v760 = vpop.f32.mrb[0].mxu0
        %v761 = vadd.f32 %v664, %v760
        %v762 = vpop.f32.mrb[0].mxu0
        %763 = vmatprep.mubr.bf16.mxu0 0
        %764 = vmatmul.mubr.bf16.gmra.mrb[0].mxu0 %v591
        %v765 = vpop.f32.mrb[0].mxu0
        %v766 = vadd.f32 %v669, %v765
        %v767 = vpop.f32.mrb[0].mxu0
        %v768 = vpop.f32.mrb[0].mxu0
        %v769 = vadd.f32 %v672, %v768
        %v770 = vpop.f32.mrb[0].mxu0
        %771 = vmatprep.mubr.bf16.mxu0 0
        %772 = vmatmul.mubr.bf16.gmra.mrb[0].mxu0 %v594
        %v773 = vpop.f32.mrb[0].mxu0
        %v774 = vadd.f32 %v677, %v773
        %v775 = vpop.f32.mrb[0].mxu0
        %v776 = vpop.f32.mrb[0].mxu0
        %v777 = vadd.f32 %v680, %v776
        %v778 = vpop.f32.mrb[0].mxu0
        %779 = vmatprep.mubr.bf16.mxu0 0
        %780 = vmatmul.mubr.bf16.gmra.mrb[0].mxu0 %v597
        %v781 = vpop.f32.mrb[0].mxu0
        %v782 = vadd.f32 %v685, %v781
        %v783 = vpop.f32.mrb[0].mxu0
        %v784 = vpop.f32.mrb[0].mxu0
        %v785 = vadd.f32 %v688, %v784
        %v786 = vpop.f32.mrb[0].mxu0
        %787 = vmatprep.mubr.bf16.mxu0 0
        %788 = vmatmul.mubr.bf16.gmra.mrb[0].mxu0 %v600
        %v789 = vpop.f32.mrb[0].mxu0
        %v790 = vadd.f32 %v693, %v789
        %v791 = vpop.f32.mrb[0].mxu0
        %v792 = vpop.f32.mrb[0].mxu0
        %v793 = vadd.f32 %v696, %v792
        %v794 = vpop.f32.mrb[0].mxu0
        %795 = vdwg.mxu0
        %v796 = vmax.f32 %v734, 0.0
        %v797 = vmax.f32 %v737, 0.0
        %v798 = vmax.f32 %v742, 0.0
        %v799 = vmax.f32 %v745, 0.0
        %v800 = vmax.f32 %v750, 0.0
        %v801 = vmax.f32 %v753, 0.0
        %v802 = vmax.f32 %v758, 0.0
        %v803 = vmax.f32 %v761, 0.0
        %v804 = vmax.f32 %v766, 0.0
        %v805 = vmax.f32 %v769, 0.0
        %v806 = vmax.f32 %v774, 0.0
        %v807 = vmax.f32 %v777, 0.0
        %v808 = vmax.f32 %v782, 0.0
        %v809 = vmax.f32 %v785, 0.0
        %v810 = vmax.f32 %v790, 0.0
        %v811 = vmax.f32 %v793, 0.0
        %v812 = vld [vmem:[%s264] sm:$0xf]
        %v813 = vld [vmem:[%s264 + $0x4] sm:$0xf]
        %v814 = vld [vmem:[%s264 + $0x8] sm:$0xf]
        %v815 = vld [vmem:[%s264 + $0xc] sm:$0xf]
        %v816 = vld [vmem:[%s264 + $0x10] sm:$0xf]
        %v817 = vld [vmem:[%s264 + $0x14] sm:$0xf]
        %v818 = vld [vmem:[%s264 + $0x18] sm:$0xf]
        %v819 = vld [vmem:[%s264 + $0x1c] sm:$0xf]
        %v820 = vld [vmem:[%s264 + $0x20] sm:$0xf]
        %v821 = vld [vmem:[%s264 + $0x24] sm:$0xf]
        %v822 = vld [vmem:[%s264 + $0x28] sm:$0xf]
        %v823 = vld [vmem:[%s264 + $0x2c] sm:$0xf]
        %v824 = vld [vmem:[%s264 + $0x30] sm:$0xf]
        %v825 = vld [vmem:[%s264 + $0x34] sm:$0xf]
        %v826 = vld [vmem:[%s264 + $0x38] sm:$0xf]
        %v827 = vld [vmem:[%s264 + $0x3c] sm:$0xf]
        %v828 = vunpack.c.l.bf16 %v812
        %v829 = vunpack.c.l.bf16 %v813
        %v830 = vunpack.c.l.bf16 %v814
        %v831 = vunpack.c.l.bf16 %v815
        %v832 = vunpack.c.l.bf16 %v816
        %v833 = vunpack.c.l.bf16 %v817
        %v834 = vunpack.c.l.bf16 %v818
        %v835 = vunpack.c.l.bf16 %v819
        %v836 = vunpack.c.l.bf16 %v820
        %v837 = vunpack.c.l.bf16 %v821
        %v838 = vunpack.c.l.bf16 %v822
        %v839 = vunpack.c.l.bf16 %v823
        %v840 = vunpack.c.l.bf16 %v824
        %v841 = vunpack.c.l.bf16 %v825
        %v842 = vunpack.c.l.bf16 %v826
        %v843 = vunpack.c.l.bf16 %v827
        %v844 = vld [vmem:[%s270] sm:$0xf]
        %v845 = vld [vmem:[%s270 + $0x4] sm:$0xf]
        %v846 = vld [vmem:[%s270 + $0x8] sm:$0xf]
        %v847 = vld [vmem:[%s270 + $0xc] sm:$0xf]
        %v848 = vld [vmem:[%s270 + $0x10] sm:$0xf]
        %v849 = vld [vmem:[%s270 + $0x14] sm:$0xf]
        %v850 = vld [vmem:[%s270 + $0x18] sm:$0xf]
        %v851 = vld [vmem:[%s270 + $0x1c] sm:$0xf]
        %v852 = vld [vmem:[%s270 + $0x20] sm:$0xf]
        %v853 = vld [vmem:[%s270 + $0x24] sm:$0xf]
        %v854 = vld [vmem:[%s270 + $0x28] sm:$0xf]
        %v855 = vld [vmem:[%s270 + $0x2c] sm:$0xf]
        %v856 = vld [vmem:[%s270 + $0x30] sm:$0xf]
        %v857 = vld [vmem:[%s270 + $0x34] sm:$0xf]
        %v858 = vld [vmem:[%s270 + $0x38] sm:$0xf]
        %v859 = vld [vmem:[%s270 + $0x3c] sm:$0xf]
        %v860 = vunpack.c.l.bf16 %v844
        %v861 = vunpack.c.l.bf16 %v845
        %v862 = vunpack.c.l.bf16 %v846
        %v863 = vunpack.c.l.bf16 %v847
        %v864 = vunpack.c.l.bf16 %v848
        %v865 = vunpack.c.l.bf16 %v849
        %v866 = vunpack.c.l.bf16 %v850
        %v867 = vunpack.c.l.bf16 %v851
        %v868 = vunpack.c.l.bf16 %v852
        %v869 = vunpack.c.l.bf16 %v853
        %v870 = vunpack.c.l.bf16 %v854
        %v871 = vunpack.c.l.bf16 %v855
        %v872 = vunpack.c.l.bf16 %v856
        %v873 = vunpack.c.l.bf16 %v857
        %v874 = vunpack.c.l.bf16 %v858
        %v875 = vunpack.c.l.bf16 %v859
        %892 = vrot.lane.b32.xlu0 %v828, 32
        %v893 = vpop.permute.xlu0 %892
        %894 = vrot.lane.b32.xlu0 %v829, 32
        %v895 = vpop.permute.xlu0 %894
        %896 = vrot.lane.b32.xlu0 %v830, 32
        %v897 = vpop.permute.xlu0 %896
        %898 = vrot.lane.b32.xlu0 %v831, 32
        %v899 = vpop.permute.xlu0 %898
        %900 = vrot.lane.b32.xlu0 %v832, 32
        %v901 = vpop.permute.xlu0 %900
        %902 = vrot.lane.b32.xlu0 %v833, 32
        %v903 = vpop.permute.xlu0 %902
        %904 = vrot.lane.b32.xlu0 %v834, 32
        %v905 = vpop.permute.xlu0 %904
        %906 = vrot.lane.b32.xlu0 %v835, 32
        %v907 = vpop.permute.xlu0 %906
        %908 = vrot.lane.b32.xlu0 %v836, 32
        %v909 = vpop.permute.xlu0 %908
        %910 = vrot.lane.b32.xlu0 %v837, 32
        %v911 = vpop.permute.xlu0 %910
        %912 = vrot.lane.b32.xlu0 %v838, 32
        %v913 = vpop.permute.xlu0 %912
        %914 = vrot.lane.b32.xlu0 %v839, 32
        %v915 = vpop.permute.xlu0 %914
        %916 = vrot.lane.b32.xlu0 %v840, 32
        %v917 = vpop.permute.xlu0 %916
        %918 = vrot.lane.b32.xlu0 %v841, 32
        %v919 = vpop.permute.xlu0 %918
        %920 = vrot.lane.b32.xlu0 %v842, 32
        %v921 = vpop.permute.xlu0 %920
        %922 = vrot.lane.b32.xlu0 %v843, 32
        %v923 = vpop.permute.xlu0 %922
        %v940 = vsel %vm577, %v796, %v893
        %v941 = vsel %vm577, %v797, %v895
        %v942 = vsel %vm577, %v798, %v897
        %v943 = vsel %vm577, %v799, %v899
        %v944 = vsel %vm577, %v800, %v901
        %v945 = vsel %vm577, %v801, %v903
        %v946 = vsel %vm577, %v802, %v905
        %v947 = vsel %vm577, %v803, %v907
        %v948 = vsel %vm577, %v804, %v909
        %v949 = vsel %vm577, %v805, %v911
        %v950 = vsel %vm577, %v806, %v913
        %v951 = vsel %vm577, %v807, %v915
        %v952 = vsel %vm577, %v808, %v917
        %v953 = vsel %vm577, %v809, %v919
        %v954 = vsel %vm577, %v810, %v921
        %v955 = vsel %vm577, %v811, %v923
        %956 = vst [vmem:[%s252] sm:$0xff] %v940
        %957 = vst [vmem:[%s252 + $0x8] sm:$0xff] %v860
        %958 = vst [vmem:[%s252 + $0x10] sm:$0xff] %v941
        %959 = vst [vmem:[%s252 + $0x18] sm:$0xff] %v861
        %960 = vst [vmem:[%s252 + $0x20] sm:$0xff] %v942
        %961 = vst [vmem:[%s252 + $0x28] sm:$0xff] %v862
        %962 = vst [vmem:[%s252 + $0x30] sm:$0xff] %v943
        %963 = vst [vmem:[%s252 + $0x38] sm:$0xff] %v863
        %964 = vst [vmem:[%s252 + $0x40] sm:$0xff] %v944
        %965 = vst [vmem:[%s252 + $0x48] sm:$0xff] %v864
        %966 = vst [vmem:[%s252 + $0x50] sm:$0xff] %v945
        %967 = vst [vmem:[%s252 + $0x58] sm:$0xff] %v865
        %968 = vst [vmem:[%s252 + $0x60] sm:$0xff] %v946
        %969 = vst [vmem:[%s252 + $0x68] sm:$0xff] %v866
        %970 = vst [vmem:[%s252 + $0x70] sm:$0xff] %v947
        %971 = vst [vmem:[%s252 + $0x78] sm:$0xff] %v867
        %972 = vst [vmem:[%s252 + $0x80] sm:$0xff] %v948
        %973 = vst [vmem:[%s252 + $0x88] sm:$0xff] %v868
        %974 = vst [vmem:[%s252 + $0x90] sm:$0xff] %v949
        %975 = vst [vmem:[%s252 + $0x98] sm:$0xff] %v869
        %976 = vst [vmem:[%s252 + $0xa0] sm:$0xff] %v950
        %977 = vst [vmem:[%s252 + $0xa8] sm:$0xff] %v870
        %978 = vst [vmem:[%s252 + $0xb0] sm:$0xff] %v951
        %979 = vst [vmem:[%s252 + $0xb8] sm:$0xff] %v871
        %980 = vst [vmem:[%s252 + $0xc0] sm:$0xff] %v952
        %981 = vst [vmem:[%s252 + $0xc8] sm:$0xff] %v872
        %982 = vst [vmem:[%s252 + $0xd0] sm:$0xff] %v953
        %983 = vst [vmem:[%s252 + $0xd8] sm:$0xff] %v873
        %984 = vst [vmem:[%s252 + $0xe0] sm:$0xff] %v954
        %985 = vst [vmem:[%s252 + $0xe8] sm:$0xff] %v874
        %986 = vst [vmem:[%s252 + $0xf0] sm:$0xff] %v955
        %987 = vst [vmem:[%s252 + $0xf8] sm:$0xff] %v875
        %s988 = sand.u32 %s147, 1
        %s989 = scalar_lea.sflag [#allocation3], %s988
        %s990 = sand.u32 %s147, 1
        %s991 = smul.addr %s990, 256
        %s992 = scalar_lea.vmem [#allocation2], %s991
        // Predicated region
        $region41: #{inception4c_forward.5} parent=39 // pred_check
          %p993 = pneg %p157
        $region42: #{inception4c_forward.5} parent=39 // pred_check_branch
          %995 = sbr.rel (%p993) target = $region44
        $region43: #{inception4c_forward.5} parent=39 // pred_region
          %s996 = smul.u32 16, %s19
          %s998 = ssub.s32 4096, 4096
          %999 = vsyncadd %s989, %s998
          %s1000 = smul.addr %s996, 2
          %s1001 = smul.addr %s1000, 128
          %s1002 = scalar_lea.hbm %s5, %s1001
          %s1003 = sshll.u32 %s992, 4
          %s1004 = int_to_ptr.vmem [resolvable:$true] %s1003
          %1009 = dma.vmem_to_hbm [thread:$0]  %s1004, 4096, %s1002, %s989, 256, 256, 16
        $region44: #{inception4c_forward.5} parent=39 // pred_fallthru
          _
      $region40: #{inception4c_forward.5} parent=5 // pred_fallthru
        _
      %p1010 = scmp.le.s32.totalorder 2, %s14
      // Predicated region
      $region45: #{inception4c_forward.5} parent=5 // pred_check
        %p1011 = pneg %p1010
      $region46: #{inception4c_forward.5} parent=5 // pred_check_branch
        %1013 = sbr.rel (%p1011) target = $region48
      $region47: #{inception4c_forward.5} parent=5 // pred_region
        %s1014 = ssub.s32 %s14, 2
        // Predicated region
        $region49: #{inception4c_forward.5} parent=47 // pred_check
          %p1015 = pneg %p163
        $region50: #{inception4c_forward.5} parent=47 // pred_check_branch
          %1017 = sbr.rel (%p1015) target = $region52
        $region51: #{inception4c_forward.5} parent=47 // pred_region
          %s1018 = sand.u32 %s148, 1
          %s1019 = scalar_lea.sflag [#allocation3], %s1018
          %s1020 = sand.u32 %s148, 1
          %s1021 = smul.addr %s1020, 256
          %s1022 = scalar_lea.vmem [#allocation2], %s1021
          %1023 = dma.done %s1019, 4096
        $region52: #{inception4c_forward.5} parent=47 // pred_fallthru
          _
      $region48: #{inception4c_forward.5} parent=5 // pred_fallthru
        _
    $region6: #{inception4c_forward.5} parent=1 // loop_footer
      %s18 = sadd.s32 1, %s14
    $region7: #{inception4c_forward.5} parent=1 // loop_footer_branch
      %13 = sbr.rel target = $region3
    $region8: #{inception4c_forward.5} parent=1 // loop_exit
      _
    %1024 = vsyncpa [#allocation3], 1
    %s1025 = scalar_lea.sflag [#allocation3], 1
    %1026 = vsyncpa %s1025, 1

</llo_original>
